<compile_context>
chip_gen: v6e
topology: v6e:2x2x1
jax: 0.10.0
libtpu: 0.0.40
codegen_flags: <defaults>
</compile_context>

<pallas_src>
import math
import functools

import jax
import jax.numpy as jnp
from jax.experimental import pallas as pl
from jax.experimental.pallas import tpu as pltpu


def encoder_layer_kernel(x_ref,
                         wqkv_ref, bqkv_ref,
                         wo_ref, bo_ref,
                         g1_ref, be1_ref,
                         w1_ref, bf1_ref, w2_ref, bf2_ref,
                         g2_ref, be2_ref,
                         out_ref,
                         attn_scratch,
                         *, num_heads, seq_len):
    rows, D = x_ref.shape            # rows = Bb * S  (lane-dense 2-D slab)
    S = seq_len
    Bb = rows // S
    H = num_heads
    depth = D // H
    scale = 1.0 / math.sqrt(float(depth))
    bf16 = jnp.bfloat16

    x2 = x_ref[...]                                                    # (rows, D) f32

    # ---- fused QKV projection: bf16 operands, f32 accumulation ----
    qkv = jnp.dot(x2.astype(bf16), wqkv_ref[...],
                  preferred_element_type=jnp.float32) + bqkv_ref[...]  # (rows, 3D) f32

    # ---- multi-head self-attention (mask is None in this configuration) ----
    # Heads as a short static loop over static lane slices; each head's output
    # is scattered into a static lane slice of one VMEM scratch (no lane-axis
    # concatenate / relayout).  Attention math stays f32.
    for h in range(H):
        q_off = h * depth
        k_off = D + h * depth
        v_off = 2 * D + h * depth
        qh = qkv[:, q_off:q_off + depth].reshape(Bb, S, depth)
        kh = qkv[:, k_off:k_off + depth].reshape(Bb, S, depth)
        vh = qkv[:, v_off:v_off + depth].reshape(Bb, S, depth)

        logits = jnp.einsum('bqd,bkd->bqk', qh, kh,
                            preferred_element_type=jnp.float32) * scale  # (Bb, S, S)
        logits = logits - jnp.max(logits, axis=-1, keepdims=True)
        p = jnp.exp(logits)
        denom = jnp.sum(p, axis=-1, keepdims=True)
        # Exact reciprocal: approx=True (EUP vrcp, ~2^-12 rel err) is cheaper but
        # would compound with bf16 operand rounding against the tolerance.
        attn = p * pl.reciprocal(denom, approx=False)
        oh = jnp.einsum('bqk,bkd->bqd', attn, vh,
                        preferred_element_type=jnp.float32)              # (Bb, S, depth)
        attn_scratch[:, q_off:q_off + depth] = oh.reshape(rows, depth)

    attn_rows = attn_scratch[...]                                        # (rows, D) f32
    attn_out = jnp.dot(attn_rows.astype(bf16), wo_ref[...],
                       preferred_element_type=jnp.float32) + bo_ref[...]
    # dropout1: identity (eval mode)

    # ---- residual + layernorm1 (single-pass stats: var = E[y^2] - mu^2) ----
    y1 = x2 + attn_out
    mu1 = jnp.mean(y1, axis=-1, keepdims=True)
    var1 = jnp.mean(y1 * y1, axis=-1, keepdims=True) - mu1 * mu1
    out1 = (y1 - mu1) * jax.lax.rsqrt(var1 + 1e-5) * g1_ref[...] + be1_ref[...]

    # ---- positionwise feed-forward (bf16 operands, f32 accumulation) ----
    h1 = jnp.dot(out1.astype(bf16), w1_ref[...],
                 preferred_element_type=jnp.float32) + bf1_ref[...]
    h1 = jnp.maximum(h1, 0.0)
    # FFN internal dropout: identity (eval mode)
    ffn = jnp.dot(h1.astype(bf16), w2_ref[...],
                  preferred_element_type=jnp.float32) + bf2_ref[...]
    # dropout2: identity (eval mode)

    # ---- residual + layernorm2 ----
    y2 = out1 + ffn
    mu2 = jnp.mean(y2, axis=-1, keepdims=True)
    var2 = jnp.mean(y2 * y2, axis=-1, keepdims=True) - mu2 * mu2
    out_ref[...] = (y2 - mu2) * jax.lax.rsqrt(var2 + 1e-5) * g2_ref[...] + be2_ref[...]


def _full_spec(w):
    n = w.ndim
    return pl.BlockSpec(w.shape, lambda i, n=n: (0,) * n)


def _num_tensorcores_per_chip():
    """Structured HW query (review: avoid device_kind substring matching)."""
    try:
        info = pltpu.get_tpu_info()
    except Exception:
        return 1
    for attr in ("num_cores", "core_count", "num_tensorcores", "tensorcores_per_chip"):
        v = getattr(info, attr, None)
        if isinstance(v, int) and v > 0:
            return v
    return 1


def encoder_layer(x, params, num_heads):
    B, S, D = x.shape
    d_ff = params["w1"].shape[0]
    depth = D // num_heads
    bf16 = jnp.bfloat16

    # --- host-side weight prep: fuse QKV, pre-transpose to (in, out), and cast
    #     matmul weights to bf16.  Biases / LN params stay f32. ---
    wqkv = jnp.concatenate([params["wq"], params["wk"], params["wv"]], axis=0).T.astype(bf16)
    bqkv = jnp.concatenate([params["bq"], params["bk"], params["bv"]], axis=1)        # (1, 3D) f32
    woT = params["wo"].T.astype(bf16)                                                 # (D, D)
    w1T = params["w1"].T.astype(bf16)                                                 # (D, d_ff)
    w2T = params["w2"].T.astype(bf16)                                                 # (d_ff, D)

    weight_args = (
        wqkv, bqkv, woT, params["bo"],
        params["g1"], params["be1"],
        w1T, params["bf1"], w2T, params["bf2"],
        params["g2"], params["be2"],
    )

    # --- grid: one big step per TensorCore; single step on single-TC chips ---
    num_tc = _num_tensorcores_per_chip()
    if num_tc > 1 and B >= num_tc and B % num_tc == 0:
        steps = num_tc
        dims = ("parallel",)
    else:
        steps = 1
        dims = ("arbitrary",)
    rows_per_step = (B // steps) * S

    # --- lane-dense 2-D slabs in/out; reshape outside the kernel ---
    x2d = x.reshape(B * S, D)
    x_spec = pl.BlockSpec((rows_per_step, D), lambda i: (i, 0))
    out_spec = pl.BlockSpec((rows_per_step, D), lambda i: (i, 0))

    # --- advisory cost estimate for the XLA scheduler ---
    flops = (2 * B * S * D * (3 * D)                     # fused QKV projection
             + 2 * (2 * B * num_heads * S * S * depth)   # logits + weighted sum
             + 2 * B * S * D * D                         # output projection
             + 2 * (2 * B * S * D * d_ff))               # FFN fc1 + fc2
    transcendentals = B * num_heads * S * S              # softmax exp
    weight_bytes = sum(int(w.size) * int(w.dtype.itemsize) for w in weight_args)
    bytes_accessed = 4 * int(x.size) + weight_bytes + 4 * B * S * D

    kernel = functools.partial(encoder_layer_kernel, num_heads=num_heads, seq_len=S)

    out2d = pl.pallas_call(
        kernel,
        out_shape=jax.ShapeDtypeStruct((B * S, D), jnp.float32),
        grid_spec=pltpu.PrefetchScalarGridSpec(
            num_scalar_prefetch=0,
            grid=(steps,),
            in_specs=[x_spec] + [_full_spec(w) for w in weight_args],
            out_specs=out_spec,
            scratch_shapes=[pltpu.VMEM((rows_per_step, D), jnp.float32)],
        ),
        compiler_params=pltpu.CompilerParams(dimension_semantics=dims),
        cost_estimate=pl.CostEstimate(flops=flops,
                                      transcendentals=transcendentals,
                                      bytes_accessed=bytes_accessed),
    )(x2d, *weight_args)

    return out2d.reshape(B, S, D)


def reference_encoder_layer(x, params, num_heads, *, bf16_matmuls=False):
    """Pure-JAX reference matching the PyTorch forward (eval mode).

    bf16_matmuls=True mirrors the kernel's precision (bf16 operands at the four
    weight matmuls, f32 accumulation, f32 softmax/LayerNorm).
    """
    B, S, D = x.shape
    H = num_heads
    depth = D // H

    def cast(z):
        return z.astype(jnp.bfloat16) if bf16_matmuls else z

    def linear(z, w, b):  # w is (out, in) like nn.Linear
        return jnp.einsum("bsd,od->bso", cast(z), cast(w),
                          preferred_element_type=jnp.float32) + b

    q = linear(x, params["wq"], params["bq"])
    k = linear(x, params["wk"], params["bk"])
    v = linear(x, params["wv"], params["bv"])

    def split(z):  # (B, S, D) -> (B, H, S, depth)
        return z.reshape(B, S, H, depth).transpose(0, 2, 1, 3)

    q, k, v = split(q), split(k), split(v)
    logits = jnp.einsum("bhqd,bhkd->bhqk", q, k,
                        preferred_element_type=jnp.float32) / math.sqrt(depth)
    logits = logits - jnp.max(logits, axis=-1, keepdims=True)
    p = jnp.exp(logits)
    attn = p / jnp.sum(p, axis=-1, keepdims=True)
    o = jnp.einsum("bhqk,bhkd->bhqd", attn, v, preferred_element_type=jnp.float32)
    o = o.transpose(0, 2, 1, 3).reshape(B, S, D)
    attn_out = linear(o, params["wo"], params["bo"])

    def ln(z, g, b):
        mu = jnp.mean(z, axis=-1, keepdims=True)
        var = jnp.mean((z - mu) ** 2, axis=-1, keepdims=True)
        return (z - mu) * jax.lax.rsqrt(var + 1e-5) * g + b

    out1 = ln(x + attn_out, params["g1"], params["be1"])
    h = jnp.maximum(linear(out1, params["w1"], params["bf1"]), 0.0)
    ffn = linear(h, params["w2"], params["bf2"])
    return ln(out1 + ffn, params["g2"], params["be2"])


def make_params(key, d_model, d_ff):
    ks = jax.random.split(key, 12)
    s = 1.0 / math.sqrt(d_model)
    return {
        "wq": jax.random.normal(ks[0], (d_model, d_model), jnp.float32) * s,
        "bq": jax.random.normal(ks[1], (1, d_model), jnp.float32) * 0.1,
        "wk": jax.random.normal(ks[2], (d_model, d_model), jnp.float32) * s,
        "bk": jax.random.normal(ks[3], (1, d_model), jnp.float32) * 0.1,
        "wv": jax.random.normal(ks[4], (d_model, d_model), jnp.float32) * s,
        "bv": jax.random.normal(ks[5], (1, d_model), jnp.float32) * 0.1,
        "wo": jax.random.normal(ks[6], (d_model, d_model), jnp.float32) * s,
        "bo": jax.random.normal(ks[7], (1, d_model), jnp.float32) * 0.1,
        "w1": jax.random.normal(ks[8], (d_ff, d_model), jnp.float32) * s,
        "bf1": jax.random.normal(ks[9], (1, d_ff), jnp.float32) * 0.1,
        "w2": jax.random.normal(ks[10], (d_model, d_ff), jnp.float32) * (1.0 / math.sqrt(d_ff)),
        "bf2": jax.random.normal(ks[11], (1, d_model), jnp.float32) * 0.1,
        "g1": jnp.ones((1, d_model), jnp.float32),
        "be1": jnp.zeros((1, d_model), jnp.float32),
        "g2": jnp.ones((1, d_model), jnp.float32),
        "be2": jnp.zeros((1, d_model), jnp.float32),
    }


if __name__ == "__main__":
    B, S, d_model, num_heads, d_ff = 2, 8, 32, 4, 64

    key = jax.random.PRNGKey(0)
    kx, kp = jax.random.split(key)
    x = jax.random.normal(kx, (B, S, d_model), jnp.float32)
    params = make_params(kp, d_model, d_ff)

    out = jax.block_until_ready(encoder_layer(x, params, num_heads))
    assert out.shape == (B, S, d_model)

    # Tight check vs a reference that mirrors the kernel's precision
    # (bf16 matmul operands, f32 accumulation, f32 softmax/LN).
    ref_matched = reference_encoder_layer(x, params, num_heads, bf16_matmuls=True)
    assert jnp.allclose(out, ref_matched, atol=5e-3, rtol=5e-3), \
        "mismatch vs matched-precision JAX reference"

    # Loose sanity check vs the full-f32 reference: only expected difference is
    # bf16 operand rounding (~1% relative).
    ref_f32 = reference_encoder_layer(x, params, num_heads, bf16_matmuls=False)
    rel = jnp.linalg.norm(out - ref_f32) / jnp.linalg.norm(ref_f32)
    assert float(rel) < 0.1, f"relative L2 error vs f32 reference too large: {float(rel)}"

    print("KERNEL_OK")
</pallas_src>

<mosaic_0001>
module attributes {stable_mosaic.version = 11 : i64} {
  func.func @encoder_layer_kernel(%arg0: i32, %arg1: memref<16x32xf32, #tpu.memory_space<vmem>>, %arg2: memref<32x96xbf16, #tpu.memory_space<vmem>>, %arg3: memref<1x96xf32, #tpu.memory_space<vmem>>, %arg4: memref<32x32xbf16, #tpu.memory_space<vmem>>, %arg5: memref<1x32xf32, #tpu.memory_space<vmem>>, %arg6: memref<1x32xf32, #tpu.memory_space<vmem>>, %arg7: memref<1x32xf32, #tpu.memory_space<vmem>>, %arg8: memref<32x64xbf16, #tpu.memory_space<vmem>>, %arg9: memref<1x64xf32, #tpu.memory_space<vmem>>, %arg10: memref<64x32xbf16, #tpu.memory_space<vmem>>, %arg11: memref<1x32xf32, #tpu.memory_space<vmem>>, %arg12: memref<1x32xf32, #tpu.memory_space<vmem>>, %arg13: memref<1x32xf32, #tpu.memory_space<vmem>>, %arg14: memref<16x32xf32, #tpu.memory_space<vmem>>, %arg15: memref<16x32xf32, #tpu.memory_space<vmem>>) attributes {dimension_semantics = [#tpu.dimension_semantics<arbitrary>], iteration_bounds = array<i64: 1>, scalar_prefetch = 0 : i64, scratch_operands = 1 : i64, tpu.core_type = #tpu.core_type<tc>, window_params = [{transform_indices = @transform_0, window_bounds = array<i64: 16, 32>}, {pipeline_mode = #tpu.pipeline_mode<synchronous>, transform_indices = @transform_1, window_bounds = array<i64: 32, 96>}, {pipeline_mode = #tpu.pipeline_mode<synchronous>, transform_indices = @transform_2, window_bounds = array<i64: 1, 96>}, {pipeline_mode = #tpu.pipeline_mode<synchronous>, transform_indices = @transform_3, window_bounds = array<i64: 32, 32>}, {pipeline_mode = #tpu.pipeline_mode<synchronous>, transform_indices = @transform_4, window_bounds = array<i64: 1, 32>}, {pipeline_mode = #tpu.pipeline_mode<synchronous>, transform_indices = @transform_5, window_bounds = array<i64: 1, 32>}, {pipeline_mode = #tpu.pipeline_mode<synchronous>, transform_indices = @transform_6, window_bounds = array<i64: 1, 32>}, {pipeline_mode = #tpu.pipeline_mode<synchronous>, transform_indices = @transform_7, window_bounds = array<i64: 32, 64>}, {pipeline_mode = #tpu.pipeline_mode<synchronous>, transform_indices = @transform_8, window_bounds = array<i64: 1, 64>}, {pipeline_mode = #tpu.pipeline_mode<synchronous>, transform_indices = @transform_9, window_bounds = array<i64: 64, 32>}, {pipeline_mode = #tpu.pipeline_mode<synchronous>, transform_indices = @transform_10, window_bounds = array<i64: 1, 32>}, {pipeline_mode = #tpu.pipeline_mode<synchronous>, transform_indices = @transform_11, window_bounds = array<i64: 1, 32>}, {pipeline_mode = #tpu.pipeline_mode<synchronous>, transform_indices = @transform_12, window_bounds = array<i64: 1, 32>}, {transform_indices = @transform_13, window_bounds = array<i64: 16, 32>}]} {
    %c0 = arith.constant 0 : index
    %c0_0 = arith.constant 0 : index
    %0 = vector.load %arg1[%c0, %c0_0] : memref<16x32xf32, #tpu.memory_space<vmem>>, vector<16x32xf32>
    %1 = arith.truncf %0 : vector<16x32xf32> to vector<16x32xbf16>
    %c0_1 = arith.constant 0 : index
    %c0_2 = arith.constant 0 : index
    %2 = vector.load %arg2[%c0_1, %c0_2] : memref<32x96xbf16, #tpu.memory_space<vmem>>, vector<32x96xbf16>
    %cst = arith.constant dense<0.000000e+00> : vector<16x96xf32>
    %3 = tpu.matmul %1, %2, %cst {dimension_numbers = #tpu.dot_dimension_numbers<[1], [0], [0], [1], [0, 0, 1, 1], [], []>} : vector<16x32xbf16>, vector<32x96xbf16>, vector<16x96xf32> -> vector<16x96xf32>
    %c0_3 = arith.constant 0 : index
    %c0_4 = arith.constant 0 : index
    %4 = vector.load %arg3[%c0_3, %c0_4] : memref<1x96xf32, #tpu.memory_space<vmem>>, vector<1x96xf32>
    %5 = vector.broadcast %4 : vector<1x96xf32> to vector<16x96xf32>
    %6 = arith.addf %3, %5 : vector<16x96xf32>
    %7 = vector.extract_strided_slice %6 {offsets = [0, 0], sizes = [16, 8], strides = [1, 1]} : vector<16x96xf32> to vector<16x8xf32>
    %8 = vector.shape_cast %7 : vector<16x8xf32> to vector<2x8x8xf32>
    %9 = vector.extract_strided_slice %6 {offsets = [0, 32], sizes = [16, 8], strides = [1, 1]} : vector<16x96xf32> to vector<16x8xf32>
    %10 = vector.shape_cast %9 : vector<16x8xf32> to vector<2x8x8xf32>
    %11 = vector.extract_strided_slice %6 {offsets = [0, 64], sizes = [16, 8], strides = [1, 1]} : vector<16x96xf32> to vector<16x8xf32>
    %12 = vector.shape_cast %11 : vector<16x8xf32> to vector<2x8x8xf32>
    "tpu.trace_start"() <{level = 10 : i32, message = "bqd,bkd->bqk"}> : () -> ()
    %cst_5 = arith.constant dense<0.000000e+00> : vector<2x8x8xf32>
    %13 = tpu.matmul %8, %10, %cst_5 {dimension_numbers = #tpu.dot_dimension_numbers<[2], [2], [1], [1], [0, 0, 0, 1, 1, 1], [0], [0]>} : vector<2x8x8xf32>, vector<2x8x8xf32>, vector<2x8x8xf32> -> vector<2x8x8xf32>
    "tpu.trace_stop"() : () -> ()
    %cst_6 = arith.constant 0.353553385 : f32
    %14 = vector.broadcast %cst_6 : f32 to vector<2x8x8xf32>
    %15 = arith.mulf %13, %14 : vector<2x8x8xf32>
    %cst_7 = arith.constant dense<0xFF800000> : vector<2x8xf32>
    %16 = vector.multi_reduction <maximumf>, %15, %cst_7 [2] : vector<2x8x8xf32> to vector<2x8xf32>
    %17 = vector.shape_cast %16 : vector<2x8xf32> to vector<2x8x1xf32>
    %18 = vector.broadcast %17 : vector<2x8x1xf32> to vector<2x8x8xf32>
    %19 = arith.subf %15, %18 : vector<2x8x8xf32>
    %20 = math.exp %19 : vector<2x8x8xf32>
    %cst_8 = arith.constant dense<0.000000e+00> : vector<2x8xf32>
    %21 = vector.multi_reduction <add>, %20, %cst_8 [2] : vector<2x8x8xf32> to vector<2x8xf32>
    %22 = vector.shape_cast %21 : vector<2x8xf32> to vector<2x8x1xf32>
    %23 = tpu.reciprocal %22 : vector<2x8x1xf32> -> vector<2x8x1xf32>
    %24 = vector.broadcast %23 : vector<2x8x1xf32> to vector<2x8x8xf32>
    %25 = arith.mulf %20, %24 : vector<2x8x8xf32>
    "tpu.trace_start"() <{level = 10 : i32, message = "bqk,bkd->bqd"}> : () -> ()
    %cst_9 = arith.constant dense<0.000000e+00> : vector<2x8x8xf32>
    %26 = tpu.matmul %25, %12, %cst_9 {dimension_numbers = #tpu.dot_dimension_numbers<[2], [1], [1], [2], [0, 0, 0, 1, 1, 2], [0], [0]>} : vector<2x8x8xf32>, vector<2x8x8xf32>, vector<2x8x8xf32> -> vector<2x8x8xf32>
    "tpu.trace_stop"() : () -> ()
    %27 = vector.shape_cast %26 : vector<2x8x8xf32> to vector<16x8xf32>
    %c0_10 = arith.constant 0 : index
    %c0_11 = arith.constant 0 : index
    %28 = vector.load %arg15[%c0_10, %c0_11] : memref<16x32xf32, #tpu.memory_space<vmem>>, vector<16x8xf32>
    tpu.vector_store %arg15[%c0_10, %c0_11], %27 {strides = array<i32>} : memref<16x32xf32, #tpu.memory_space<vmem>>, vector<16x8xf32>,
    %29 = vector.extract_strided_slice %6 {offsets = [0, 8], sizes = [16, 8], strides = [1, 1]} : vector<16x96xf32> to vector<16x8xf32>
    %30 = vector.shape_cast %29 : vector<16x8xf32> to vector<2x8x8xf32>
    %31 = vector.extract_strided_slice %6 {offsets = [0, 40], sizes = [16, 8], strides = [1, 1]} : vector<16x96xf32> to vector<16x8xf32>
    %32 = vector.shape_cast %31 : vector<16x8xf32> to vector<2x8x8xf32>
    %33 = vector.extract_strided_slice %6 {offsets = [0, 72], sizes = [16, 8], strides = [1, 1]} : vector<16x96xf32> to vector<16x8xf32>
    %34 = vector.shape_cast %33 : vector<16x8xf32> to vector<2x8x8xf32>
    "tpu.trace_start"() <{level = 10 : i32, message = "bqd,bkd->bqk"}> : () -> ()
    %cst_12 = arith.constant dense<0.000000e+00> : vector<2x8x8xf32>
    %35 = tpu.matmul %30, %32, %cst_12 {dimension_numbers = #tpu.dot_dimension_numbers<[2], [2], [1], [1], [0, 0, 0, 1, 1, 1], [0], [0]>} : vector<2x8x8xf32>, vector<2x8x8xf32>, vector<2x8x8xf32> -> vector<2x8x8xf32>
    "tpu.trace_stop"() : () -> ()
    %cst_13 = arith.constant 0.353553385 : f32
    %36 = vector.broadcast %cst_13 : f32 to vector<2x8x8xf32>
    %37 = arith.mulf %35, %36 : vector<2x8x8xf32>
    %cst_14 = arith.constant dense<0xFF800000> : vector<2x8xf32>
    %38 = vector.multi_reduction <maximumf>, %37, %cst_14 [2] : vector<2x8x8xf32> to vector<2x8xf32>
    %39 = vector.shape_cast %38 : vector<2x8xf32> to vector<2x8x1xf32>
    %40 = vector.broadcast %39 : vector<2x8x1xf32> to vector<2x8x8xf32>
    %41 = arith.subf %37, %40 : vector<2x8x8xf32>
    %42 = math.exp %41 : vector<2x8x8xf32>
    %cst_15 = arith.constant dense<0.000000e+00> : vector<2x8xf32>
    %43 = vector.multi_reduction <add>, %42, %cst_15 [2] : vector<2x8x8xf32> to vector<2x8xf32>
    %44 = vector.shape_cast %43 : vector<2x8xf32> to vector<2x8x1xf32>
    %45 = tpu.reciprocal %44 : vector<2x8x1xf32> -> vector<2x8x1xf32>
    %46 = vector.broadcast %45 : vector<2x8x1xf32> to vector<2x8x8xf32>
    %47 = arith.mulf %42, %46 : vector<2x8x8xf32>
    "tpu.trace_start"() <{level = 10 : i32, message = "bqk,bkd->bqd"}> : () -> ()
    %cst_16 = arith.constant dense<0.000000e+00> : vector<2x8x8xf32>
    %48 = tpu.matmul %47, %34, %cst_16 {dimension_numbers = #tpu.dot_dimension_numbers<[2], [1], [1], [2], [0, 0, 0, 1, 1, 2], [0], [0]>} : vector<2x8x8xf32>, vector<2x8x8xf32>, vector<2x8x8xf32> -> vector<2x8x8xf32>
    "tpu.trace_stop"() : () -> ()
    %49 = vector.shape_cast %48 : vector<2x8x8xf32> to vector<16x8xf32>
    %c0_17 = arith.constant 0 : index
    %c8 = arith.constant 8 : index
    %50 = vector.load %arg15[%c0_17, %c8] : memref<16x32xf32, #tpu.memory_space<vmem>>, vector<16x8xf32>
    tpu.vector_store %arg15[%c0_17, %c8], %49 {strides = array<i32>} : memref<16x32xf32, #tpu.memory_space<vmem>>, vector<16x8xf32>,
    %51 = vector.extract_strided_slice %6 {offsets = [0, 16], sizes = [16, 8], strides = [1, 1]} : vector<16x96xf32> to vector<16x8xf32>
    %52 = vector.shape_cast %51 : vector<16x8xf32> to vector<2x8x8xf32>
    %53 = vector.extract_strided_slice %6 {offsets = [0, 48], sizes = [16, 8], strides = [1, 1]} : vector<16x96xf32> to vector<16x8xf32>
    %54 = vector.shape_cast %53 : vector<16x8xf32> to vector<2x8x8xf32>
    %55 = vector.extract_strided_slice %6 {offsets = [0, 80], sizes = [16, 8], strides = [1, 1]} : vector<16x96xf32> to vector<16x8xf32>
    %56 = vector.shape_cast %55 : vector<16x8xf32> to vector<2x8x8xf32>
    "tpu.trace_start"() <{level = 10 : i32, message = "bqd,bkd->bqk"}> : () -> ()
    %cst_18 = arith.constant dense<0.000000e+00> : vector<2x8x8xf32>
    %57 = tpu.matmul %52, %54, %cst_18 {dimension_numbers = #tpu.dot_dimension_numbers<[2], [2], [1], [1], [0, 0, 0, 1, 1, 1], [0], [0]>} : vector<2x8x8xf32>, vector<2x8x8xf32>, vector<2x8x8xf32> -> vector<2x8x8xf32>
    "tpu.trace_stop"() : () -> ()
    %cst_19 = arith.constant 0.353553385 : f32
    %58 = vector.broadcast %cst_19 : f32 to vector<2x8x8xf32>
    %59 = arith.mulf %57, %58 : vector<2x8x8xf32>
    %cst_20 = arith.constant dense<0xFF800000> : vector<2x8xf32>
    %60 = vector.multi_reduction <maximumf>, %59, %cst_20 [2] : vector<2x8x8xf32> to vector<2x8xf32>
    %61 = vector.shape_cast %60 : vector<2x8xf32> to vector<2x8x1xf32>
    %62 = vector.broadcast %61 : vector<2x8x1xf32> to vector<2x8x8xf32>
    %63 = arith.subf %59, %62 : vector<2x8x8xf32>
    %64 = math.exp %63 : vector<2x8x8xf32>
    %cst_21 = arith.constant dense<0.000000e+00> : vector<2x8xf32>
    %65 = vector.multi_reduction <add>, %64, %cst_21 [2] : vector<2x8x8xf32> to vector<2x8xf32>
    %66 = vector.shape_cast %65 : vector<2x8xf32> to vector<2x8x1xf32>
    %67 = tpu.reciprocal %66 : vector<2x8x1xf32> -> vector<2x8x1xf32>
    %68 = vector.broadcast %67 : vector<2x8x1xf32> to vector<2x8x8xf32>
    %69 = arith.mulf %64, %68 : vector<2x8x8xf32>
    "tpu.trace_start"() <{level = 10 : i32, message = "bqk,bkd->bqd"}> : () -> ()
    %cst_22 = arith.constant dense<0.000000e+00> : vector<2x8x8xf32>
    %70 = tpu.matmul %69, %56, %cst_22 {dimension_numbers = #tpu.dot_dimension_numbers<[2], [1], [1], [2], [0, 0, 0, 1, 1, 2], [0], [0]>} : vector<2x8x8xf32>, vector<2x8x8xf32>, vector<2x8x8xf32> -> vector<2x8x8xf32>
    "tpu.trace_stop"() : () -> ()
    %71 = vector.shape_cast %70 : vector<2x8x8xf32> to vector<16x8xf32>
    %c0_23 = arith.constant 0 : index
    %c16 = arith.constant 16 : index
    %72 = vector.load %arg15[%c0_23, %c16] : memref<16x32xf32, #tpu.memory_space<vmem>>, vector<16x8xf32>
    tpu.vector_store %arg15[%c0_23, %c16], %71 {strides = array<i32>} : memref<16x32xf32, #tpu.memory_space<vmem>>, vector<16x8xf32>,
    %73 = vector.extract_strided_slice %6 {offsets = [0, 24], sizes = [16, 8], strides = [1, 1]} : vector<16x96xf32> to vector<16x8xf32>
    %74 = vector.shape_cast %73 : vector<16x8xf32> to vector<2x8x8xf32>
    %75 = vector.extract_strided_slice %6 {offsets = [0, 56], sizes = [16, 8], strides = [1, 1]} : vector<16x96xf32> to vector<16x8xf32>
    %76 = vector.shape_cast %75 : vector<16x8xf32> to vector<2x8x8xf32>
    %77 = vector.extract_strided_slice %6 {offsets = [0, 88], sizes = [16, 8], strides = [1, 1]} : vector<16x96xf32> to vector<16x8xf32>
    %78 = vector.shape_cast %77 : vector<16x8xf32> to vector<2x8x8xf32>
    "tpu.trace_start"() <{level = 10 : i32, message = "bqd,bkd->bqk"}> : () -> ()
    %cst_24 = arith.constant dense<0.000000e+00> : vector<2x8x8xf32>
    %79 = tpu.matmul %74, %76, %cst_24 {dimension_numbers = #tpu.dot_dimension_numbers<[2], [2], [1], [1], [0, 0, 0, 1, 1, 1], [0], [0]>} : vector<2x8x8xf32>, vector<2x8x8xf32>, vector<2x8x8xf32> -> vector<2x8x8xf32>
    "tpu.trace_stop"() : () -> ()
    %cst_25 = arith.constant 0.353553385 : f32
    %80 = vector.broadcast %cst_25 : f32 to vector<2x8x8xf32>
    %81 = arith.mulf %79, %80 : vector<2x8x8xf32>
    %cst_26 = arith.constant dense<0xFF800000> : vector<2x8xf32>
    %82 = vector.multi_reduction <maximumf>, %81, %cst_26 [2] : vector<2x8x8xf32> to vector<2x8xf32>
    %83 = vector.shape_cast %82 : vector<2x8xf32> to vector<2x8x1xf32>
    %84 = vector.broadcast %83 : vector<2x8x1xf32> to vector<2x8x8xf32>
    %85 = arith.subf %81, %84 : vector<2x8x8xf32>
    %86 = math.exp %85 : vector<2x8x8xf32>
    %cst_27 = arith.constant dense<0.000000e+00> : vector<2x8xf32>
    %87 = vector.multi_reduction <add>, %86, %cst_27 [2] : vector<2x8x8xf32> to vector<2x8xf32>
    %88 = vector.shape_cast %87 : vector<2x8xf32> to vector<2x8x1xf32>
    %89 = tpu.reciprocal %88 : vector<2x8x1xf32> -> vector<2x8x1xf32>
    %90 = vector.broadcast %89 : vector<2x8x1xf32> to vector<2x8x8xf32>
    %91 = arith.mulf %86, %90 : vector<2x8x8xf32>
    "tpu.trace_start"() <{level = 10 : i32, message = "bqk,bkd->bqd"}> : () -> ()
    %cst_28 = arith.constant dense<0.000000e+00> : vector<2x8x8xf32>
    %92 = tpu.matmul %91, %78, %cst_28 {dimension_numbers = #tpu.dot_dimension_numbers<[2], [1], [1], [2], [0, 0, 0, 1, 1, 2], [0], [0]>} : vector<2x8x8xf32>, vector<2x8x8xf32>, vector<2x8x8xf32> -> vector<2x8x8xf32>
    "tpu.trace_stop"() : () -> ()
    %93 = vector.shape_cast %92 : vector<2x8x8xf32> to vector<16x8xf32>
    %c0_29 = arith.constant 0 : index
    %c24 = arith.constant 24 : index
    %94 = vector.load %arg15[%c0_29, %c24] : memref<16x32xf32, #tpu.memory_space<vmem>>, vector<16x8xf32>
    tpu.vector_store %arg15[%c0_29, %c24], %93 {strides = array<i32>} : memref<16x32xf32, #tpu.memory_space<vmem>>, vector<16x8xf32>,
    %c0_30 = arith.constant 0 : index
    %c0_31 = arith.constant 0 : index
    %95 = vector.load %arg15[%c0_30, %c0_31] : memref<16x32xf32, #tpu.memory_space<vmem>>, vector<16x32xf32>
    %96 = arith.truncf %95 : vector<16x32xf32> to vector<16x32xbf16>
    %c0_32 = arith.constant 0 : index
    %c0_33 = arith.constant 0 : index
    %97 = vector.load %arg4[%c0_32, %c0_33] : memref<32x32xbf16, #tpu.memory_space<vmem>>, vector<32x32xbf16>
    %cst_34 = arith.constant dense<0.000000e+00> : vector<16x32xf32>
    %98 = tpu.matmul %96, %97, %cst_34 {dimension_numbers = #tpu.dot_dimension_numbers<[1], [0], [0], [1], [0, 0, 1, 1], [], []>} : vector<16x32xbf16>, vector<32x32xbf16>, vector<16x32xf32> -> vector<16x32xf32>
    %c0_35 = arith.constant 0 : index
    %c0_36 = arith.constant 0 : index
    %99 = vector.load %arg5[%c0_35, %c0_36] : memref<1x32xf32, #tpu.memory_space<vmem>>, vector<1x32xf32>
    %100 = vector.broadcast %99 : vector<1x32xf32> to vector<16x32xf32>
    %101 = arith.addf %98, %100 : vector<16x32xf32>
    %102 = arith.addf %0, %101 : vector<16x32xf32>
    %cst_37 = arith.constant dense<0.000000e+00> : vector<16xf32>
    %103 = vector.multi_reduction <add>, %102, %cst_37 [1] : vector<16x32xf32> to vector<16xf32>
    %104 = vector.shape_cast %103 : vector<16xf32> to vector<16x1xf32>
    %cst_38 = arith.constant 3.200000e+01 : f32
    %105 = vector.broadcast %cst_38 : f32 to vector<16x1xf32>
    %106 = arith.divf %104, %105 : vector<16x1xf32>
    %107 = arith.mulf %102, %102 : vector<16x32xf32>
    %cst_39 = arith.constant dense<0.000000e+00> : vector<16xf32>
    %108 = vector.multi_reduction <add>, %107, %cst_39 [1] : vector<16x32xf32> to vector<16xf32>
    %109 = vector.shape_cast %108 : vector<16xf32> to vector<16x1xf32>
    %cst_40 = arith.constant 3.200000e+01 : f32
    %110 = vector.broadcast %cst_40 : f32 to vector<16x1xf32>
    %111 = arith.divf %109, %110 : vector<16x1xf32>
    %112 = arith.mulf %106, %106 : vector<16x1xf32>
    %113 = arith.subf %111, %112 : vector<16x1xf32>
    %114 = vector.broadcast %106 : vector<16x1xf32> to vector<16x32xf32>
    %115 = arith.subf %102, %114 : vector<16x32xf32>
    %cst_41 = arith.constant 9.99999974E-6 : f32
    %116 = vector.broadcast %cst_41 : f32 to vector<16x1xf32>
    %117 = arith.addf %113, %116 : vector<16x1xf32>
    %118 = math.rsqrt %117 : vector<16x1xf32>
    %119 = vector.broadcast %118 : vector<16x1xf32> to vector<16x32xf32>
    %120 = arith.mulf %115, %119 : vector<16x32xf32>
    %c0_42 = arith.constant 0 : index
    %c0_43 = arith.constant 0 : index
    %121 = vector.load %arg6[%c0_42, %c0_43] : memref<1x32xf32, #tpu.memory_space<vmem>>, vector<1x32xf32>
    %122 = vector.broadcast %121 : vector<1x32xf32> to vector<16x32xf32>
    %123 = arith.mulf %120, %122 : vector<16x32xf32>
    %c0_44 = arith.constant 0 : index
    %c0_45 = arith.constant 0 : index
    %124 = vector.load %arg7[%c0_44, %c0_45] : memref<1x32xf32, #tpu.memory_space<vmem>>, vector<1x32xf32>
    %125 = vector.broadcast %124 : vector<1x32xf32> to vector<16x32xf32>
    %126 = arith.addf %123, %125 : vector<16x32xf32>
    %127 = arith.truncf %126 : vector<16x32xf32> to vector<16x32xbf16>
    %c0_46 = arith.constant 0 : index
    %c0_47 = arith.constant 0 : index
    %128 = vector.load %arg8[%c0_46, %c0_47] : memref<32x64xbf16, #tpu.memory_space<vmem>>, vector<32x64xbf16>
    %cst_48 = arith.constant dense<0.000000e+00> : vector<16x64xf32>
    %129 = tpu.matmul %127, %128, %cst_48 {dimension_numbers = #tpu.dot_dimension_numbers<[1], [0], [0], [1], [0, 0, 1, 1], [], []>} : vector<16x32xbf16>, vector<32x64xbf16>, vector<16x64xf32> -> vector<16x64xf32>
    %c0_49 = arith.constant 0 : index
    %c0_50 = arith.constant 0 : index
    %130 = vector.load %arg9[%c0_49, %c0_50] : memref<1x64xf32, #tpu.memory_space<vmem>>, vector<1x64xf32>
    %131 = vector.broadcast %130 : vector<1x64xf32> to vector<16x64xf32>
    %132 = arith.addf %129, %131 : vector<16x64xf32>
    %cst_51 = arith.constant 0.000000e+00 : f32
    %133 = vector.broadcast %cst_51 : f32 to vector<16x64xf32>
    %134 = arith.maximumf %132, %133 : vector<16x64xf32>
    %135 = arith.truncf %134 : vector<16x64xf32> to vector<16x64xbf16>
    %c0_52 = arith.constant 0 : index
    %c0_53 = arith.constant 0 : index
    %136 = vector.load %arg10[%c0_52, %c0_53] : memref<64x32xbf16, #tpu.memory_space<vmem>>, vector<64x32xbf16>
    %cst_54 = arith.constant dense<0.000000e+00> : vector<16x32xf32>
    %137 = tpu.matmul %135, %136, %cst_54 {dimension_numbers = #tpu.dot_dimension_numbers<[1], [0], [0], [1], [0, 0, 1, 1], [], []>} : vector<16x64xbf16>, vector<64x32xbf16>, vector<16x32xf32> -> vector<16x32xf32>
    %c0_55 = arith.constant 0 : index
    %c0_56 = arith.constant 0 : index
    %138 = vector.load %arg11[%c0_55, %c0_56] : memref<1x32xf32, #tpu.memory_space<vmem>>, vector<1x32xf32>
    %139 = vector.broadcast %138 : vector<1x32xf32> to vector<16x32xf32>
    %140 = arith.addf %137, %139 : vector<16x32xf32>
    %141 = arith.addf %126, %140 : vector<16x32xf32>
    %cst_57 = arith.constant dense<0.000000e+00> : vector<16xf32>
    %142 = vector.multi_reduction <add>, %141, %cst_57 [1] : vector<16x32xf32> to vector<16xf32>
    %143 = vector.shape_cast %142 : vector<16xf32> to vector<16x1xf32>
    %cst_58 = arith.constant 3.200000e+01 : f32
    %144 = vector.broadcast %cst_58 : f32 to vector<16x1xf32>
    %145 = arith.divf %143, %144 : vector<16x1xf32>
    %146 = arith.mulf %141, %141 : vector<16x32xf32>
    %cst_59 = arith.constant dense<0.000000e+00> : vector<16xf32>
    %147 = vector.multi_reduction <add>, %146, %cst_59 [1] : vector<16x32xf32> to vector<16xf32>
    %148 = vector.shape_cast %147 : vector<16xf32> to vector<16x1xf32>
    %cst_60 = arith.constant 3.200000e+01 : f32
    %149 = vector.broadcast %cst_60 : f32 to vector<16x1xf32>
    %150 = arith.divf %148, %149 : vector<16x1xf32>
    %151 = arith.mulf %145, %145 : vector<16x1xf32>
    %152 = arith.subf %150, %151 : vector<16x1xf32>
    %153 = vector.broadcast %145 : vector<16x1xf32> to vector<16x32xf32>
    %154 = arith.subf %141, %153 : vector<16x32xf32>
    %cst_61 = arith.constant 9.99999974E-6 : f32
    %155 = vector.broadcast %cst_61 : f32 to vector<16x1xf32>
    %156 = arith.addf %152, %155 : vector<16x1xf32>
    %157 = math.rsqrt %156 : vector<16x1xf32>
    %158 = vector.broadcast %157 : vector<16x1xf32> to vector<16x32xf32>
    %159 = arith.mulf %154, %158 : vector<16x32xf32>
    %c0_62 = arith.constant 0 : index
    %c0_63 = arith.constant 0 : index
    %160 = vector.load %arg12[%c0_62, %c0_63] : memref<1x32xf32, #tpu.memory_space<vmem>>, vector<1x32xf32>
    %161 = vector.broadcast %160 : vector<1x32xf32> to vector<16x32xf32>
    %162 = arith.mulf %159, %161 : vector<16x32xf32>
    %c0_64 = arith.constant 0 : index
    %c0_65 = arith.constant 0 : index
    %163 = vector.load %arg13[%c0_64, %c0_65] : memref<1x32xf32, #tpu.memory_space<vmem>>, vector<1x32xf32>
    %164 = vector.broadcast %163 : vector<1x32xf32> to vector<16x32xf32>
    %165 = arith.addf %162, %164 : vector<16x32xf32>
    %c0_66 = arith.constant 0 : index
    %c0_67 = arith.constant 0 : index
    %166 = vector.load %arg14[%c0_66, %c0_67] : memref<16x32xf32, #tpu.memory_space<vmem>>, vector<16x32xf32>
    tpu.vector_store %arg14[%c0_66, %c0_67], %165 {strides = array<i32>} : memref<16x32xf32, #tpu.memory_space<vmem>>, vector<16x32xf32>,
    return
  }
  func.func @transform_0(%arg0: i32) -> (i32, i32) {
    %c0_i32 = arith.constant 0 : i32
    %c0_i32_0 = arith.constant 0 : i32
    return %arg0, %c0_i32 : i32, i32
  }
  func.func @transform_1(%arg0: i32) -> (i32, i32) {
    %c0_i32 = arith.constant 0 : i32
    %c0_i32_0 = arith.constant 0 : i32
    %c0_i32_1 = arith.constant 0 : i32
    return %c0_i32, %c0_i32_0 : i32, i32
  }
  func.func @transform_2(%arg0: i32) -> (i32, i32) {
    %c0_i32 = arith.constant 0 : i32
    %c0_i32_0 = arith.constant 0 : i32
    %c0_i32_1 = arith.constant 0 : i32
    return %c0_i32, %c0_i32_0 : i32, i32
  }
  func.func @transform_3(%arg0: i32) -> (i32, i32) {
    %c0_i32 = arith.constant 0 : i32
    %c0_i32_0 = arith.constant 0 : i32
    %c0_i32_1 = arith.constant 0 : i32
    return %c0_i32, %c0_i32_0 : i32, i32
  }
  func.func @transform_4(%arg0: i32) -> (i32, i32) {
    %c0_i32 = arith.constant 0 : i32
    %c0_i32_0 = arith.constant 0 : i32
    %c0_i32_1 = arith.constant 0 : i32
    return %c0_i32, %c0_i32_0 : i32, i32
  }
  func.func @transform_5(%arg0: i32) -> (i32, i32) {
    %c0_i32 = arith.constant 0 : i32
    %c0_i32_0 = arith.constant 0 : i32
    %c0_i32_1 = arith.constant 0 : i32
    return %c0_i32, %c0_i32_0 : i32, i32
  }
  func.func @transform_6(%arg0: i32) -> (i32, i32) {
    %c0_i32 = arith.constant 0 : i32
    %c0_i32_0 = arith.constant 0 : i32
    %c0_i32_1 = arith.constant 0 : i32
    return %c0_i32, %c0_i32_0 : i32, i32
  }
  func.func @transform_7(%arg0: i32) -> (i32, i32) {
    %c0_i32 = arith.constant 0 : i32
    %c0_i32_0 = arith.constant 0 : i32
    %c0_i32_1 = arith.constant 0 : i32
    return %c0_i32, %c0_i32_0 : i32, i32
  }
  func.func @transform_8(%arg0: i32) -> (i32, i32) {
    %c0_i32 = arith.constant 0 : i32
    %c0_i32_0 = arith.constant 0 : i32
    %c0_i32_1 = arith.constant 0 : i32
    return %c0_i32, %c0_i32_0 : i32, i32
  }
  func.func @transform_9(%arg0: i32) -> (i32, i32) {
    %c0_i32 = arith.constant 0 : i32
    %c0_i32_0 = arith.constant 0 : i32
    %c0_i32_1 = arith.constant 0 : i32
    return %c0_i32, %c0_i32_0 : i32, i32
  }
  func.func @transform_10(%arg0: i32) -> (i32, i32) {
    %c0_i32 = arith.constant 0 : i32
    %c0_i32_0 = arith.constant 0 : i32
    %c0_i32_1 = arith.constant 0 : i32
    return %c0_i32, %c0_i32_0 : i32, i32
  }
  func.func @transform_11(%arg0: i32) -> (i32, i32) {
    %c0_i32 = arith.constant 0 : i32
    %c0_i32_0 = arith.constant 0 : i32
    %c0_i32_1 = arith.constant 0 : i32
    return %c0_i32, %c0_i32_0 : i32, i32
  }
  func.func @transform_12(%arg0: i32) -> (i32, i32) {
    %c0_i32 = arith.constant 0 : i32
    %c0_i32_0 = arith.constant 0 : i32
    %c0_i32_1 = arith.constant 0 : i32
    return %c0_i32, %c0_i32_0 : i32, i32
  }
  func.func @transform_13(%arg0: i32) -> (i32, i32) {
    %c0_i32 = arith.constant 0 : i32
    %c0_i32_0 = arith.constant 0 : i32
    return %arg0, %c0_i32 : i32, i32
  }
}

</mosaic_0001>

<llo_original>
// kernel: tpu_custom_call.1
$region0: #{tpu_custom_call.1}
  #allocation0 [shape = 'u32[]', space=smem, size = 0x4, offset = 0x4, fixed_abs, tag = 'smem constant byte address 0x4 - core index']
  #allocation1 [shape = 'u32[144,128]{1,0:T(1,128)}', space=vmem, size = 0x12000, scoped, tag = 'internal scratch']
  #allocation2 [shape = 'f32[16,32]{1,0:T(8,128)}', space=vmem, size = 0x2000, scoped, tag = 'scratch operand']
  %s0 = inlined_call_operand.vmem [shape: f32[16,32], index: 0, kind: input, shape index: {}]
  %s1 = inlined_call_operand.vmem [shape: bf16[32,96], index: 1, kind: input, shape index: {}]
  %s2 = inlined_call_operand.hbm [shape: f32[1,96], index: 2, kind: input, shape index: {}]
  %s3 = inlined_call_operand.vmem [shape: bf16[32,32], index: 3, kind: input, shape index: {}]
  %s4 = inlined_call_operand.hbm [shape: f32[1,32], index: 4, kind: input, shape index: {}]
  %s5 = inlined_call_operand.hbm [shape: f32[1,32], index: 5, kind: input, shape index: {}]
  %s6 = inlined_call_operand.hbm [shape: f32[1,32], index: 6, kind: input, shape index: {}]
  %s7 = inlined_call_operand.hbm [shape: bf16[32,64], index: 7, kind: input, shape index: {}]
  %s8 = inlined_call_operand.hbm [shape: f32[1,64], index: 8, kind: input, shape index: {}]
  %s9 = inlined_call_operand.vmem [shape: bf16[64,32], index: 9, kind: input, shape index: {}]
  %s10 = inlined_call_operand.vmem [shape: f32[1,32], index: 10, kind: input, shape index: {}]
  %s11 = inlined_call_operand.vmem [shape: f32[1,32], index: 11, kind: input, shape index: {}]
  %s12 = inlined_call_operand.vmem [shape: f32[1,32], index: 12, kind: input, shape index: {}]
  %s13 = inlined_call_operand.hbm [shape: f32[16,32], index: 13, kind: output, shape index: {}]
  %s14 = sld [smem:[#allocation0]]
  $region86: #{tpu_custom_call.1} parent=0
    _
  %s16 = ssub.s32 1, %s14
  %s17 = scalar_select 0, %s16, %s14
  $region1: #{tpu_custom_call.1} parent=0
    #allocation3 [shape = 'u8[512]{0}', space=vmem, size = 0x400, scoped, tag = 'input window, operand 2, single buffered']
    #allocation4 [shape = 's32[1]{0}', space=sflag, size = 0x4, scoped, tag = 'scoped memory for tpu_custom_call.1']
    #allocation5 [shape = 's32[1]{0}', space=sflag, size = 0x4, scoped, tag = 'scoped memory for tpu_custom_call.1']
    #allocation6 [shape = 'u8[512]{0}', space=vmem, size = 0x400, scoped, tag = 'input window, operand 4, single buffered']
    #allocation7 [shape = 's32[1]{0}', space=sflag, size = 0x4, scoped, tag = 'scoped memory for tpu_custom_call.1']
    #allocation8 [shape = 'u8[512]{0}', space=vmem, size = 0x400, scoped, tag = 'input window, operand 5, single buffered']
    #allocation9 [shape = 'u8[512]{0}', space=vmem, size = 0x400, scoped, tag = 'input window, operand 6, single buffered']
    #allocation10 [shape = 's32[1]{0}', space=sflag, size = 0x4, scoped, tag = 'scoped memory for tpu_custom_call.1']
    #allocation11 [shape = 'u8[8192]{0}', space=vmem, size = 0x2000, scoped, tag = 'input window, operand 7, single buffered']
    #allocation12 [shape = 'u8[512]{0}', space=vmem, size = 0x400, scoped, tag = 'input window, operand 8, single buffered']
    #allocation13 [shape = 's32[1]{0}', space=sflag, size = 0x4, scoped, tag = 'scoped memory for tpu_custom_call.1']
    #allocation14 [shape = 'u8[8192]{0}', space=vmem, size = 0x2000, scoped, tag = 'output window, operand 0, single buffered']
    %18 = vsyncpa [#allocation4], 0
    %19 = vsyncpa [#allocation7], 0
    %20 = vsyncpa [#allocation10], 0
    %21 = vsyncpa [#allocation13], 0
    %22 = vsyncpa [#allocation5], 0
    // Predicated region
    $region2: #{tpu_custom_call.1} parent=1 // pred_check
      _
    $region3: #{tpu_custom_call.1} parent=1 // pred_check_branch
      %24 = sbr.rel (0) target = $region5
    $region4: #{tpu_custom_call.1} parent=1 // pred_region
      _
    $region5: #{tpu_custom_call.1} parent=1 // pred_fallthru
      _
    // Predicated region
    $region6: #{tpu_custom_call.1} parent=1 // pred_check
      _
    $region7: #{tpu_custom_call.1} parent=1 // pred_check_branch
      %26 = sbr.rel (0) target = $region9
    $region8: #{tpu_custom_call.1} parent=1 // pred_region
      _
    $region9: #{tpu_custom_call.1} parent=1 // pred_fallthru
      _
    // Predicated region
    $region10: #{tpu_custom_call.1} parent=1 // pred_check
      _
    $region11: #{tpu_custom_call.1} parent=1 // pred_check_branch
      %28 = sbr.rel (0) target = $region13
    $region12: #{tpu_custom_call.1} parent=1 // pred_region
      %s30 = ssub.s32 16, 16
      %31 = vsyncadd [#allocation4], %s30
      %s33 = sshll.u32 [#allocation3], 4
      %s34 = int_to_ptr.vmem [resolvable:$true] %s33
      %36 = dma.hbm_to_vmem [thread:$0]  %s2, 16, %s34, [#allocation4]
    $region13: #{tpu_custom_call.1} parent=1 // pred_fallthru
      _
    // Predicated region
    $region14: #{tpu_custom_call.1} parent=1 // pred_check
      _
    $region15: #{tpu_custom_call.1} parent=1 // pred_check_branch
      %38 = sbr.rel (0) target = $region17
    $region16: #{tpu_custom_call.1} parent=1 // pred_region
      _
    $region17: #{tpu_custom_call.1} parent=1 // pred_fallthru
      _
    // Predicated region
    $region18: #{tpu_custom_call.1} parent=1 // pred_check
      _
    $region19: #{tpu_custom_call.1} parent=1 // pred_check_branch
      %40 = sbr.rel (0) target = $region21
    $region20: #{tpu_custom_call.1} parent=1 // pred_region
      %s42 = ssub.s32 16, 16
      %43 = vsyncadd [#allocation7], %s42
      %s45 = sshll.u32 [#allocation6], 4
      %s46 = int_to_ptr.vmem [resolvable:$true] %s45
      %48 = dma.hbm_to_vmem [thread:$0]  %s4, 16, %s46, [#allocation7]
    $region21: #{tpu_custom_call.1} parent=1 // pred_fallthru
      _
    // Predicated region
    $region22: #{tpu_custom_call.1} parent=1 // pred_check
      _
    $region23: #{tpu_custom_call.1} parent=1 // pred_check_branch
      %50 = sbr.rel (0) target = $region25
    $region24: #{tpu_custom_call.1} parent=1 // pred_region
      %s52 = ssub.s32 16, 16
      %53 = vsyncadd [#allocation7], %s52
      %s55 = sshll.u32 [#allocation8], 4
      %s56 = int_to_ptr.vmem [resolvable:$true] %s55
      %58 = dma.hbm_to_vmem [thread:$0]  %s5, 16, %s56, [#allocation7]
    $region25: #{tpu_custom_call.1} parent=1 // pred_fallthru
      _
    // Predicated region
    $region26: #{tpu_custom_call.1} parent=1 // pred_check
      _
    $region27: #{tpu_custom_call.1} parent=1 // pred_check_branch
      %60 = sbr.rel (0) target = $region29
    $region28: #{tpu_custom_call.1} parent=1 // pred_region
      %s62 = ssub.s32 16, 16
      %63 = vsyncadd [#allocation10], %s62
      %s65 = sshll.u32 [#allocation9], 4
      %s66 = int_to_ptr.vmem [resolvable:$true] %s65
      %68 = dma.hbm_to_vmem [thread:$0]  %s6, 16, %s66, [#allocation10]
    $region29: #{tpu_custom_call.1} parent=1 // pred_fallthru
      _
    // Predicated region
    $region30: #{tpu_custom_call.1} parent=1 // pred_check
      _
    $region31: #{tpu_custom_call.1} parent=1 // pred_check_branch
      %70 = sbr.rel (0) target = $region33
    $region32: #{tpu_custom_call.1} parent=1 // pred_region
      %s72 = ssub.s32 256, 256
      %73 = vsyncadd [#allocation10], %s72
      %s74 = sshll.u32 [#allocation11], 4
      %s75 = int_to_ptr.vmem [resolvable:$true] %s74
      %80 = dma.hbm_to_vmem [thread:$0]  %s7, 256, %s75, [#allocation10], 64, 64, 4
    $region33: #{tpu_custom_call.1} parent=1 // pred_fallthru
      _
    // Predicated region
    $region34: #{tpu_custom_call.1} parent=1 // pred_check
      _
    $region35: #{tpu_custom_call.1} parent=1 // pred_check_branch
      %82 = sbr.rel (0) target = $region37
    $region36: #{tpu_custom_call.1} parent=1 // pred_region
      %s84 = ssub.s32 16, 16
      %85 = vsyncadd [#allocation13], %s84
      %s87 = sshll.u32 [#allocation12], 4
      %s88 = int_to_ptr.vmem [resolvable:$true] %s87
      %90 = dma.hbm_to_vmem [thread:$0]  %s8, 16, %s88, [#allocation13]
    $region37: #{tpu_custom_call.1} parent=1 // pred_fallthru
      _
    // Predicated region
    $region38: #{tpu_custom_call.1} parent=1 // pred_check
      _
    $region39: #{tpu_custom_call.1} parent=1 // pred_check_branch
      %92 = sbr.rel (0) target = $region41
    $region40: #{tpu_custom_call.1} parent=1 // pred_region
      _
    $region41: #{tpu_custom_call.1} parent=1 // pred_fallthru
      _
    // Predicated region
    $region42: #{tpu_custom_call.1} parent=1 // pred_check
      _
    $region43: #{tpu_custom_call.1} parent=1 // pred_check_branch
      %94 = sbr.rel (0) target = $region45
    $region44: #{tpu_custom_call.1} parent=1 // pred_region
      _
    $region45: #{tpu_custom_call.1} parent=1 // pred_fallthru
      _
    // Predicated region
    $region46: #{tpu_custom_call.1} parent=1 // pred_check
      _
    $region47: #{tpu_custom_call.1} parent=1 // pred_check_branch
      %96 = sbr.rel (0) target = $region49
    $region48: #{tpu_custom_call.1} parent=1 // pred_region
      _
    $region49: #{tpu_custom_call.1} parent=1 // pred_fallthru
      _
    // Predicated region
    $region50: #{tpu_custom_call.1} parent=1 // pred_check
      _
    $region51: #{tpu_custom_call.1} parent=1 // pred_check_branch
      %98 = sbr.rel (0) target = $region53
    $region52: #{tpu_custom_call.1} parent=1 // pred_region
      _
    $region53: #{tpu_custom_call.1} parent=1 // pred_fallthru
      _
    // Predicated region
    $region54: #{tpu_custom_call.1} parent=1 // pred_check
      _
    $region55: #{tpu_custom_call.1} parent=1 // pred_check_branch
      %100 = sbr.rel (0) target = $region57
    $region56: #{tpu_custom_call.1} parent=1 // pred_region
      %101 = dma.done [#allocation4], 16
    $region57: #{tpu_custom_call.1} parent=1 // pred_fallthru
      _
    // Predicated region
    $region58: #{tpu_custom_call.1} parent=1 // pred_check
      _
    $region59: #{tpu_custom_call.1} parent=1 // pred_check_branch
      %103 = sbr.rel (0) target = $region61
    $region60: #{tpu_custom_call.1} parent=1 // pred_region
      %104 = dma.done [#allocation7], 16
    $region61: #{tpu_custom_call.1} parent=1 // pred_fallthru
      _
    // Predicated region
    $region62: #{tpu_custom_call.1} parent=1 // pred_check
      _
    $region63: #{tpu_custom_call.1} parent=1 // pred_check_branch
      %106 = sbr.rel (0) target = $region65
    $region64: #{tpu_custom_call.1} parent=1 // pred_region
      %107 = dma.done [#allocation7], 16
    $region65: #{tpu_custom_call.1} parent=1 // pred_fallthru
      _
    // Predicated region
    $region66: #{tpu_custom_call.1} parent=1 // pred_check
      _
    $region67: #{tpu_custom_call.1} parent=1 // pred_check_branch
      %109 = sbr.rel (0) target = $region69
    $region68: #{tpu_custom_call.1} parent=1 // pred_region
      %110 = dma.done [#allocation10], 16
    $region69: #{tpu_custom_call.1} parent=1 // pred_fallthru
      _
    // Predicated region
    $region70: #{tpu_custom_call.1} parent=1 // pred_check
      _
    $region71: #{tpu_custom_call.1} parent=1 // pred_check_branch
      %112 = sbr.rel (0) target = $region73
    $region72: #{tpu_custom_call.1} parent=1 // pred_region
      %113 = dma.done [#allocation10], 256
    $region73: #{tpu_custom_call.1} parent=1 // pred_fallthru
      _
    // Predicated region
    $region74: #{tpu_custom_call.1} parent=1 // pred_check
      _
    $region75: #{tpu_custom_call.1} parent=1 // pred_check_branch
      %115 = sbr.rel (0) target = $region77
    $region76: #{tpu_custom_call.1} parent=1 // pred_region
      %116 = dma.done [#allocation13], 16
    $region77: #{tpu_custom_call.1} parent=1 // pred_fallthru
      _
    %v118 = vld [vmem:[%s0] sm:$0xff]
    %v119 = vld [vmem:[%s0 + $0x8] sm:$0xff]
    %v120 = vpack.c.bf16 %v119, %v118
    %v121 = vld [vmem:[%s1] sm:$0xf]
    %v122 = vld [vmem:[%s1 + $0x4] sm:$0xf]
    %v123 = vld [vmem:[%s1 + $0x8] sm:$0xf]
    %v124 = vld [vmem:[%s1 + $0xc] sm:$0xf]
    %v125 = vld [vmem:[#allocation3] sm:$0x1]
    %v127 = vlaneseq
    %v128 = vshrl.u32 %v127, 7
    %v129 = vsub.s32 0, %v128
    %v130 = vrot.slane %v125, %v129
    %v136 = vunpack.c.l.b16 %v121
    %v137 = vunpack.c.l.b16 %v122
    %v138 = vunpack.c.l.b16 %v123
    %v139 = vunpack.c.l.b16 %v124
    %v140 = vpack.c.b16 %v137, %v136
    %v141 = vpack.c.b16 %v139, %v138
    %vm144 = vcmask 261120
    %v146 = vsel %vm144, %v120, 0
    %148 = vmatprep.subr.bf16.mxu0 0
    %149 = vmatpush1.bf16.msra.mxu0 0
    %150 = vmatprep.subr.bf16.mxu0 0
    %151 = vmatpush1.bf16.msra.mxu0 0
    %152 = vmatprep.subr.bf16.mxu0 0
    %153 = vmatpush1.bf16.msra.mxu0 0
    %154 = vmatprep.subr.bf16.mxu0 0
    %155 = vmatpush1.bf16.msra.mxu0 0
    %156 = vmatprep.subr.bf16.mxu0 0
    %157 = vmatpush1.bf16.msra.mxu0 0
    %158 = vmatprep.subr.bf16.mxu0 0
    %159 = vmatpush1.bf16.msra.mxu0 0
    %160 = vmatprep.subr.bf16.mxu0 0
    %161 = vmatpush1.bf16.msra.mxu0 %v141
    %162 = vmatprep.subr.bf16.mxu0 0
    %163 = vmatpush1.bf16.msra.mxu0 %v140
    %164 = vmatprep.subr.bf16.mxu0 0
    %165 = vmatpush2.bf16.msra.mxu0 0
    %166 = vmatprep.subr.bf16.mxu0 0
    %167 = vmatpush2.bf16.msra.mxu0 0
    %168 = vmatprep.subr.bf16.mxu0 0
    %169 = vmatpush2.bf16.msra.mxu0 0
    %170 = vmatprep.subr.bf16.mxu0 0
    %171 = vmatpush2.bf16.msra.mxu0 0
    %172 = vmatprep.subr.bf16.mxu0 0
    %173 = vmatpush2.bf16.msra.mxu0 0
    %174 = vmatprep.subr.bf16.mxu0 0
    %175 = vmatpush2.bf16.msra.mxu0 0
    %176 = vmatprep.subr.bf16.mxu0 0
    %177 = vmatpush2.bf16.msra.mxu0 0
    %178 = vmatprep.subr.bf16.mxu0 0
    %179 = vmatpush2.bf16.msra.mxu0 0
    %180 = vmatprep.mubr.bf16.mxu0 0
    %181 = vmatmul.mubr.bf16.gmra.mxu0 %v146
    %v182 = vpop.f32.mrf.mxu0
    %v183 = vadd.f32 %v130, %v182
    %v184 = vpop.f32.mrf.mxu0
    %v185 = vpop.f32.mrf.mxu0
    %v186 = vadd.f32 %v130, %v185
    %v187 = vpop.f32.mrf.mxu0
    %188 = vdwg.mxu0
    %190 = vrot.lane.b32.xlu0 %v183, 96
    %v191 = vpop.permute.xlu0 %190
    %vm192 = vcmask 64512
    %v193 = vsel %vm192, %v183, 0
    %v195 = vsel %vm192, %v191, 0
    %197 = vmatprep.subr.mxu0 0.0
    %198 = vmatpush1.xpose.msra.mxu0 0.0
    %199 = vmatprep.subr.mxu0 0.0
    %200 = vmatpush1.xpose.msra.mxu0 0.0
    %201 = vmatprep.subr.mxu0 0.0
    %202 = vmatpush1.xpose.msra.mxu0 0.0
    %203 = vmatprep.subr.mxu0 0.0
    %204 = vmatpush1.xpose.msra.mxu0 0.0
    %205 = vmatprep.subr.mxu0 0.0
    %206 = vmatpush1.xpose.msra.mxu0 0.0
    %207 = vmatprep.subr.mxu0 0.0
    %208 = vmatpush1.xpose.msra.mxu0 0.0
    %209 = vmatprep.subr.mxu0 0.0
    %210 = vmatpush1.xpose.msra.mxu0 0.0
    %211 = vmatprep.subr.mxu0 0.0
    %212 = vmatpush1.xpose.msra.mxu0 0.0
    %213 = vmatprep.subr.mxu0 0.0
    %214 = vmatpush1.xpose.msra.mxu0 0.0
    %215 = vmatprep.subr.mxu0 0.0
    %216 = vmatpush1.xpose.msra.mxu0 0.0
    %217 = vmatprep.subr.mxu0 0.0
    %218 = vmatpush1.xpose.msra.mxu0 0.0
    %219 = vmatprep.subr.mxu0 0.0
    %220 = vmatpush1.xpose.msra.mxu0 0.0
    %221 = vmatprep.subr.mxu0 0.0
    %222 = vmatpush1.xpose.msra.mxu0 0.0
    %223 = vmatprep.subr.mxu0 0.0
    %224 = vmatpush1.xpose.msra.mxu0 0.0
    %225 = vmatprep.subr.mxu0 0.0
    %226 = vmatpush1.xpose.msra.mxu0 0.0
    %227 = vmatprep.subr.mxu0 0.0
    %228 = vmatpush1.xpose.msra.mxu0 %v195
    %229 = vmatprep.subr.mxu0 0.0
    %230 = vmatpush2.xpose.msra.mxu0 0.0
    %231 = vmatprep.subr.mxu0 0.0
    %232 = vmatpush2.xpose.msra.mxu0 0.0
    %233 = vmatprep.subr.mxu0 0.0
    %234 = vmatpush2.xpose.msra.mxu0 0.0
    %235 = vmatprep.subr.mxu0 0.0
    %236 = vmatpush2.xpose.msra.mxu0 0.0
    %237 = vmatprep.subr.mxu0 0.0
    %238 = vmatpush2.xpose.msra.mxu0 0.0
    %239 = vmatprep.subr.mxu0 0.0
    %240 = vmatpush2.xpose.msra.mxu0 0.0
    %241 = vmatprep.subr.mxu0 0.0
    %242 = vmatpush2.xpose.msra.mxu0 0.0
    %243 = vmatprep.subr.mxu0 0.0
    %244 = vmatpush2.xpose.msra.mxu0 0.0
    %245 = vmatprep.subr.mxu0 0.0
    %246 = vmatpush2.xpose.msra.mxu0 0.0
    %247 = vmatprep.subr.mxu0 0.0
    %248 = vmatpush2.xpose.msra.mxu0 0.0
    %249 = vmatprep.subr.mxu0 0.0
    %250 = vmatpush2.xpose.msra.mxu0 0.0
    %251 = vmatprep.subr.mxu0 0.0
    %252 = vmatpush2.xpose.msra.mxu0 0.0
    %253 = vmatprep.subr.mxu0 0.0
    %254 = vmatpush2.xpose.msra.mxu0 0.0
    %255 = vmatprep.subr.mxu0 0.0
    %256 = vmatpush2.xpose.msra.mxu0 0.0
    %257 = vmatprep.subr.mxu0 0.0
    %258 = vmatpush2.xpose.msra.mxu0 0.0
    %259 = vmatprep.subr.mxu0 0.0
    %260 = vmatpush2.xpose.msra.mxu0 0.0
    %261 = vmatprep.mubr.f32.mxu0 0.0
    %262 = vmatmul.mubr.f32.gmra.mxu0 %v193
    %v263 = vpop.f32.mrf.mxu0
    %v264 = vadd.f32 0.0, %v263
    %v265 = vpop.f32.mrf.mxu0
    %266 = vdwg.mxu0
    %268 = vrot.lane.b32.xlu0 %v186, 96
    %v269 = vpop.permute.xlu0 %268
    %v270 = vsel %vm192, %v186, 0
    %v272 = vsel %vm192, %v269, 0
    %274 = vmatprep.subr.mxu0 0.0
    %275 = vmatpush1.xpose.msra.mxu0 0.0
    %276 = vmatprep.subr.mxu0 0.0
    %277 = vmatpush1.xpose.msra.mxu0 0.0
    %278 = vmatprep.subr.mxu0 0.0
    %279 = vmatpush1.xpose.msra.mxu0 0.0
    %280 = vmatprep.subr.mxu0 0.0
    %281 = vmatpush1.xpose.msra.mxu0 0.0
    %282 = vmatprep.subr.mxu0 0.0
    %283 = vmatpush1.xpose.msra.mxu0 0.0
    %284 = vmatprep.subr.mxu0 0.0
    %285 = vmatpush1.xpose.msra.mxu0 0.0
    %286 = vmatprep.subr.mxu0 0.0
    %287 = vmatpush1.xpose.msra.mxu0 0.0
    %288 = vmatprep.subr.mxu0 0.0
    %289 = vmatpush1.xpose.msra.mxu0 0.0
    %290 = vmatprep.subr.mxu0 0.0
    %291 = vmatpush1.xpose.msra.mxu0 0.0
    %292 = vmatprep.subr.mxu0 0.0
    %293 = vmatpush1.xpose.msra.mxu0 0.0
    %294 = vmatprep.subr.mxu0 0.0
    %295 = vmatpush1.xpose.msra.mxu0 0.0
    %296 = vmatprep.subr.mxu0 0.0
    %297 = vmatpush1.xpose.msra.mxu0 0.0
    %298 = vmatprep.subr.mxu0 0.0
    %299 = vmatpush1.xpose.msra.mxu0 0.0
    %300 = vmatprep.subr.mxu0 0.0
    %301 = vmatpush1.xpose.msra.mxu0 0.0
    %302 = vmatprep.subr.mxu0 0.0
    %303 = vmatpush1.xpose.msra.mxu0 0.0
    %304 = vmatprep.subr.mxu0 0.0
    %305 = vmatpush1.xpose.msra.mxu0 %v272
    %306 = vmatprep.subr.mxu0 0.0
    %307 = vmatpush2.xpose.msra.mxu0 0.0
    %308 = vmatprep.subr.mxu0 0.0
    %309 = vmatpush2.xpose.msra.mxu0 0.0
    %310 = vmatprep.subr.mxu0 0.0
    %311 = vmatpush2.xpose.msra.mxu0 0.0
    %312 = vmatprep.subr.mxu0 0.0
    %313 = vmatpush2.xpose.msra.mxu0 0.0
    %314 = vmatprep.subr.mxu0 0.0
    %315 = vmatpush2.xpose.msra.mxu0 0.0
    %316 = vmatprep.subr.mxu0 0.0
    %317 = vmatpush2.xpose.msra.mxu0 0.0
    %318 = vmatprep.subr.mxu0 0.0
    %319 = vmatpush2.xpose.msra.mxu0 0.0
    %320 = vmatprep.subr.mxu0 0.0
    %321 = vmatpush2.xpose.msra.mxu0 0.0
    %322 = vmatprep.subr.mxu0 0.0
    %323 = vmatpush2.xpose.msra.mxu0 0.0
    %324 = vmatprep.subr.mxu0 0.0
    %325 = vmatpush2.xpose.msra.mxu0 0.0
    %326 = vmatprep.subr.mxu0 0.0
    %327 = vmatpush2.xpose.msra.mxu0 0.0
    %328 = vmatprep.subr.mxu0 0.0
    %329 = vmatpush2.xpose.msra.mxu0 0.0
    %330 = vmatprep.subr.mxu0 0.0
    %331 = vmatpush2.xpose.msra.mxu0 0.0
    %332 = vmatprep.subr.mxu0 0.0
    %333 = vmatpush2.xpose.msra.mxu0 0.0
    %334 = vmatprep.subr.mxu0 0.0
    %335 = vmatpush2.xpose.msra.mxu0 0.0
    %336 = vmatprep.subr.mxu0 0.0
    %337 = vmatpush2.xpose.msra.mxu0 0.0
    %338 = vmatprep.mubr.f32.mxu0 0.0
    %339 = vmatmul.mubr.f32.gmra.mxu0 %v270
    %v340 = vpop.f32.mrf.mxu0
    %v341 = vadd.f32 0.0, %v340
    %v342 = vpop.f32.mrf.mxu0
    %343 = vdwg.mxu0
    %v344 = vmul.f32 %v264, 0.35355338
    %v345 = vmul.f32 %v341, 0.35355338
    %v346 = vsel %vm192, %v344, -inf
    %347 = vmax.xlane.f32.xlu0 %v346
    %v348 = vpop.xlane.xlu0 %347
    %v349 = vsel %vm192, %v345, -inf
    %350 = vmax.xlane.f32.xlu0 %v349
    %v351 = vpop.xlane.xlu0 %350
    %v352 = vsub.f32 %v344, %v348
    %v353 = vsub.f32 %v345, %v351
    %v354 = vmul.f32 %v352, 1.442695
    %v355 = vpow.pop %v354
    %v356 = vmul.f32 %v353, 1.442695
    %v357 = vpow.pop %v356
    %v358 = vsel %vm192, %v355, 0.0
    %359 = vadd.xlane.f32.xlu0 %v358
    %v360 = vpop.xlane.xlu0 %359
    %v361 = vsel %vm192, %v357, 0.0
    %362 = vadd.xlane.f32.xlu0 %v361
    %v363 = vpop.xlane.xlu0 %362
    %v364 = vrcp.pop %v360
    %v365 = vrcp.pop %v363
    %v366 = vmul.f32 %v355, %v364
    %v367 = vmul.f32 %v357, %v365
    %368 = vrot.lane.b32.xlu0 %v183, 64
    %v369 = vpop.permute.xlu0 %368
    %v372 = vsel %vm192, %v366, 0
    %374 = vmatprep.subr.mxu0 0.0
    %375 = vmatpush1.msra.mxu0 0.0
    %376 = vmatprep.subr.mxu0 0.0
    %377 = vmatpush1.msra.mxu0 0.0
    %378 = vmatprep.subr.mxu0 0.0
    %379 = vmatpush1.msra.mxu0 0.0
    %380 = vmatprep.subr.mxu0 0.0
    %381 = vmatpush1.msra.mxu0 0.0
    %382 = vmatprep.subr.mxu0 0.0
    %383 = vmatpush1.msra.mxu0 0.0
    %384 = vmatprep.subr.mxu0 0.0
    %385 = vmatpush1.msra.mxu0 0.0
    %386 = vmatprep.subr.mxu0 0.0
    %387 = vmatpush1.msra.mxu0 0.0
    %388 = vmatprep.subr.mxu0 0.0
    %389 = vmatpush1.msra.mxu0 0.0
    %390 = vmatprep.subr.mxu0 0.0
    %391 = vmatpush1.msra.mxu0 0.0
    %392 = vmatprep.subr.mxu0 0.0
    %393 = vmatpush1.msra.mxu0 0.0
    %394 = vmatprep.subr.mxu0 0.0
    %395 = vmatpush1.msra.mxu0 0.0
    %396 = vmatprep.subr.mxu0 0.0
    %397 = vmatpush1.msra.mxu0 0.0
    %398 = vmatprep.subr.mxu0 0.0
    %399 = vmatpush1.msra.mxu0 0.0
    %400 = vmatprep.subr.mxu0 0.0
    %401 = vmatpush1.msra.mxu0 0.0
    %402 = vmatprep.subr.mxu0 0.0
    %403 = vmatpush1.msra.mxu0 0.0
    %404 = vmatprep.subr.mxu0 0.0
    %405 = vmatpush1.msra.mxu0 %v369
    %406 = vmatprep.subr.mxu0 0.0
    %407 = vmatpush2.msra.mxu0 0.0
    %408 = vmatprep.subr.mxu0 0.0
    %409 = vmatpush2.msra.mxu0 0.0
    %410 = vmatprep.subr.mxu0 0.0
    %411 = vmatpush2.msra.mxu0 0.0
    %412 = vmatprep.subr.mxu0 0.0
    %413 = vmatpush2.msra.mxu0 0.0
    %414 = vmatprep.subr.mxu0 0.0
    %415 = vmatpush2.msra.mxu0 0.0
    %416 = vmatprep.subr.mxu0 0.0
    %417 = vmatpush2.msra.mxu0 0.0
    %418 = vmatprep.subr.mxu0 0.0
    %419 = vmatpush2.msra.mxu0 0.0
    %420 = vmatprep.subr.mxu0 0.0
    %421 = vmatpush2.msra.mxu0 0.0
    %422 = vmatprep.subr.mxu0 0.0
    %423 = vmatpush2.msra.mxu0 0.0
    %424 = vmatprep.subr.mxu0 0.0
    %425 = vmatpush2.msra.mxu0 0.0
    %426 = vmatprep.subr.mxu0 0.0
    %427 = vmatpush2.msra.mxu0 0.0
    %428 = vmatprep.subr.mxu0 0.0
    %429 = vmatpush2.msra.mxu0 0.0
    %430 = vmatprep.subr.mxu0 0.0
    %431 = vmatpush2.msra.mxu0 0.0
    %432 = vmatprep.subr.mxu0 0.0
    %433 = vmatpush2.msra.mxu0 0.0
    %434 = vmatprep.subr.mxu0 0.0
    %435 = vmatpush2.msra.mxu0 0.0
    %436 = vmatprep.subr.mxu0 0.0
    %437 = vmatpush2.msra.mxu0 0.0
    %438 = vmatprep.mubr.f32.mxu0 0.0
    %439 = vmatmul.mubr.f32.gmra.mxu0 %v372
    %v440 = vpop.f32.mrf.mxu0
    %v441 = vadd.f32 0.0, %v440
    %v442 = vpop.f32.mrf.mxu0
    %443 = vdwg.mxu0
    %444 = vrot.lane.b32.xlu0 %v186, 64
    %v445 = vpop.permute.xlu0 %444
    %v448 = vsel %vm192, %v367, 0
    %450 = vmatprep.subr.mxu0 0.0
    %451 = vmatpush1.msra.mxu0 0.0
    %452 = vmatprep.subr.mxu0 0.0
    %453 = vmatpush1.msra.mxu0 0.0
    %454 = vmatprep.subr.mxu0 0.0
    %455 = vmatpush1.msra.mxu0 0.0
    %456 = vmatprep.subr.mxu0 0.0
    %457 = vmatpush1.msra.mxu0 0.0
    %458 = vmatprep.subr.mxu0 0.0
    %459 = vmatpush1.msra.mxu0 0.0
    %460 = vmatprep.subr.mxu0 0.0
    %461 = vmatpush1.msra.mxu0 0.0
    %462 = vmatprep.subr.mxu0 0.0
    %463 = vmatpush1.msra.mxu0 0.0
    %464 = vmatprep.subr.mxu0 0.0
    %465 = vmatpush1.msra.mxu0 0.0
    %466 = vmatprep.subr.mxu0 0.0
    %467 = vmatpush1.msra.mxu0 0.0
    %468 = vmatprep.subr.mxu0 0.0
    %469 = vmatpush1.msra.mxu0 0.0
    %470 = vmatprep.subr.mxu0 0.0
    %471 = vmatpush1.msra.mxu0 0.0
    %472 = vmatprep.subr.mxu0 0.0
    %473 = vmatpush1.msra.mxu0 0.0
    %474 = vmatprep.subr.mxu0 0.0
    %475 = vmatpush1.msra.mxu0 0.0
    %476 = vmatprep.subr.mxu0 0.0
    %477 = vmatpush1.msra.mxu0 0.0
    %478 = vmatprep.subr.mxu0 0.0
    %479 = vmatpush1.msra.mxu0 0.0
    %480 = vmatprep.subr.mxu0 0.0
    %481 = vmatpush1.msra.mxu0 %v445
    %482 = vmatprep.subr.mxu0 0.0
    %483 = vmatpush2.msra.mxu0 0.0
    %484 = vmatprep.subr.mxu0 0.0
    %485 = vmatpush2.msra.mxu0 0.0
    %486 = vmatprep.subr.mxu0 0.0
    %487 = vmatpush2.msra.mxu0 0.0
    %488 = vmatprep.subr.mxu0 0.0
    %489 = vmatpush2.msra.mxu0 0.0
    %490 = vmatprep.subr.mxu0 0.0
    %491 = vmatpush2.msra.mxu0 0.0
    %492 = vmatprep.subr.mxu0 0.0
    %493 = vmatpush2.msra.mxu0 0.0
    %494 = vmatprep.subr.mxu0 0.0
    %495 = vmatpush2.msra.mxu0 0.0
    %496 = vmatprep.subr.mxu0 0.0
    %497 = vmatpush2.msra.mxu0 0.0
    %498 = vmatprep.subr.mxu0 0.0
    %499 = vmatpush2.msra.mxu0 0.0
    %500 = vmatprep.subr.mxu0 0.0
    %501 = vmatpush2.msra.mxu0 0.0
    %502 = vmatprep.subr.mxu0 0.0
    %503 = vmatpush2.msra.mxu0 0.0
    %504 = vmatprep.subr.mxu0 0.0
    %505 = vmatpush2.msra.mxu0 0.0
    %506 = vmatprep.subr.mxu0 0.0
    %507 = vmatpush2.msra.mxu0 0.0
    %508 = vmatprep.subr.mxu0 0.0
    %509 = vmatpush2.msra.mxu0 0.0
    %510 = vmatprep.subr.mxu0 0.0
    %511 = vmatpush2.msra.mxu0 0.0
    %512 = vmatprep.subr.mxu0 0.0
    %513 = vmatpush2.msra.mxu0 0.0
    %514 = vmatprep.mubr.f32.mxu0 0.0
    %515 = vmatmul.mubr.f32.gmra.mxu0 %v448
    %v516 = vpop.f32.mrf.mxu0
    %v517 = vadd.f32 0.0, %v516
    %v518 = vpop.f32.mrf.mxu0
    %519 = vdwg.mxu0
    %520 = vst.msk [vmem:[#allocation2] sm:$0xff] %vm192, %v441
    %521 = vst.msk [vmem:[#allocation2 + $0x8] sm:$0xff] %vm192, %v517
    %522 = vrot.lane.b32.xlu0 %v183, 120
    %v523 = vpop.permute.xlu0 %522
    %524 = vrot.lane.b32.xlu0 %v183, 88
    %v525 = vpop.permute.xlu0 %524
    %v526 = vsel %vm192, %v523, 0
    %v528 = vsel %vm192, %v525, 0
    %530 = vmatprep.subr.mxu0 0.0
    %531 = vmatpush1.xpose.msra.mxu0 0.0
    %532 = vmatprep.subr.mxu0 0.0
    %533 = vmatpush1.xpose.msra.mxu0 0.0
    %534 = vmatprep.subr.mxu0 0.0
    %535 = vmatpush1.xpose.msra.mxu0 0.0
    %536 = vmatprep.subr.mxu0 0.0
    %537 = vmatpush1.xpose.msra.mxu0 0.0
    %538 = vmatprep.subr.mxu0 0.0
    %539 = vmatpush1.xpose.msra.mxu0 0.0
    %540 = vmatprep.subr.mxu0 0.0
    %541 = vmatpush1.xpose.msra.mxu0 0.0
    %542 = vmatprep.subr.mxu0 0.0
    %543 = vmatpush1.xpose.msra.mxu0 0.0
    %544 = vmatprep.subr.mxu0 0.0
    %545 = vmatpush1.xpose.msra.mxu0 0.0
    %546 = vmatprep.subr.mxu0 0.0
    %547 = vmatpush1.xpose.msra.mxu0 0.0
    %548 = vmatprep.subr.mxu0 0.0
    %549 = vmatpush1.xpose.msra.mxu0 0.0
    %550 = vmatprep.subr.mxu0 0.0
    %551 = vmatpush1.xpose.msra.mxu0 0.0
    %552 = vmatprep.subr.mxu0 0.0
    %553 = vmatpush1.xpose.msra.mxu0 0.0
    %554 = vmatprep.subr.mxu0 0.0
    %555 = vmatpush1.xpose.msra.mxu0 0.0
    %556 = vmatprep.subr.mxu0 0.0
    %557 = vmatpush1.xpose.msra.mxu0 0.0
    %558 = vmatprep.subr.mxu0 0.0
    %559 = vmatpush1.xpose.msra.mxu0 0.0
    %560 = vmatprep.subr.mxu0 0.0
    %561 = vmatpush1.xpose.msra.mxu0 %v528
    %562 = vmatprep.subr.mxu0 0.0
    %563 = vmatpush2.xpose.msra.mxu0 0.0
    %564 = vmatprep.subr.mxu0 0.0
    %565 = vmatpush2.xpose.msra.mxu0 0.0
    %566 = vmatprep.subr.mxu0 0.0
    %567 = vmatpush2.xpose.msra.mxu0 0.0
    %568 = vmatprep.subr.mxu0 0.0
    %569 = vmatpush2.xpose.msra.mxu0 0.0
    %570 = vmatprep.subr.mxu0 0.0
    %571 = vmatpush2.xpose.msra.mxu0 0.0
    %572 = vmatprep.subr.mxu0 0.0
    %573 = vmatpush2.xpose.msra.mxu0 0.0
    %574 = vmatprep.subr.mxu0 0.0
    %575 = vmatpush2.xpose.msra.mxu0 0.0
    %576 = vmatprep.subr.mxu0 0.0
    %577 = vmatpush2.xpose.msra.mxu0 0.0
    %578 = vmatprep.subr.mxu0 0.0
    %579 = vmatpush2.xpose.msra.mxu0 0.0
    %580 = vmatprep.subr.mxu0 0.0
    %581 = vmatpush2.xpose.msra.mxu0 0.0
    %582 = vmatprep.subr.mxu0 0.0
    %583 = vmatpush2.xpose.msra.mxu0 0.0
    %584 = vmatprep.subr.mxu0 0.0
    %585 = vmatpush2.xpose.msra.mxu0 0.0
    %586 = vmatprep.subr.mxu0 0.0
    %587 = vmatpush2.xpose.msra.mxu0 0.0
    %588 = vmatprep.subr.mxu0 0.0
    %589 = vmatpush2.xpose.msra.mxu0 0.0
    %590 = vmatprep.subr.mxu0 0.0
    %591 = vmatpush2.xpose.msra.mxu0 0.0
    %592 = vmatprep.subr.mxu0 0.0
    %593 = vmatpush2.xpose.msra.mxu0 0.0
    %594 = vmatprep.mubr.f32.mxu0 0.0
    %595 = vmatmul.mubr.f32.gmra.mxu0 %v526
    %v596 = vpop.f32.mrf.mxu0
    %v597 = vadd.f32 0.0, %v596
    %v598 = vpop.f32.mrf.mxu0
    %599 = vdwg.mxu0
    %600 = vrot.lane.b32.xlu0 %v186, 120
    %v601 = vpop.permute.xlu0 %600
    %602 = vrot.lane.b32.xlu0 %v186, 88
    %v603 = vpop.permute.xlu0 %602
    %v604 = vsel %vm192, %v601, 0
    %v606 = vsel %vm192, %v603, 0
    %608 = vmatprep.subr.mxu0 0.0
    %609 = vmatpush1.xpose.msra.mxu0 0.0
    %610 = vmatprep.subr.mxu0 0.0
    %611 = vmatpush1.xpose.msra.mxu0 0.0
    %612 = vmatprep.subr.mxu0 0.0
    %613 = vmatpush1.xpose.msra.mxu0 0.0
    %614 = vmatprep.subr.mxu0 0.0
    %615 = vmatpush1.xpose.msra.mxu0 0.0
    %616 = vmatprep.subr.mxu0 0.0
    %617 = vmatpush1.xpose.msra.mxu0 0.0
    %618 = vmatprep.subr.mxu0 0.0
    %619 = vmatpush1.xpose.msra.mxu0 0.0
    %620 = vmatprep.subr.mxu0 0.0
    %621 = vmatpush1.xpose.msra.mxu0 0.0
    %622 = vmatprep.subr.mxu0 0.0
    %623 = vmatpush1.xpose.msra.mxu0 0.0
    %624 = vmatprep.subr.mxu0 0.0
    %625 = vmatpush1.xpose.msra.mxu0 0.0
    %626 = vmatprep.subr.mxu0 0.0
    %627 = vmatpush1.xpose.msra.mxu0 0.0
    %628 = vmatprep.subr.mxu0 0.0
    %629 = vmatpush1.xpose.msra.mxu0 0.0
    %630 = vmatprep.subr.mxu0 0.0
    %631 = vmatpush1.xpose.msra.mxu0 0.0
    %632 = vmatprep.subr.mxu0 0.0
    %633 = vmatpush1.xpose.msra.mxu0 0.0
    %634 = vmatprep.subr.mxu0 0.0
    %635 = vmatpush1.xpose.msra.mxu0 0.0
    %636 = vmatprep.subr.mxu0 0.0
    %637 = vmatpush1.xpose.msra.mxu0 0.0
    %638 = vmatprep.subr.mxu0 0.0
    %639 = vmatpush1.xpose.msra.mxu0 %v606
    %640 = vmatprep.subr.mxu0 0.0
    %641 = vmatpush2.xpose.msra.mxu0 0.0
    %642 = vmatprep.subr.mxu0 0.0
    %643 = vmatpush2.xpose.msra.mxu0 0.0
    %644 = vmatprep.subr.mxu0 0.0
    %645 = vmatpush2.xpose.msra.mxu0 0.0
    %646 = vmatprep.subr.mxu0 0.0
    %647 = vmatpush2.xpose.msra.mxu0 0.0
    %648 = vmatprep.subr.mxu0 0.0
    %649 = vmatpush2.xpose.msra.mxu0 0.0
    %650 = vmatprep.subr.mxu0 0.0
    %651 = vmatpush2.xpose.msra.mxu0 0.0
    %652 = vmatprep.subr.mxu0 0.0
    %653 = vmatpush2.xpose.msra.mxu0 0.0
    %654 = vmatprep.subr.mxu0 0.0
    %655 = vmatpush2.xpose.msra.mxu0 0.0
    %656 = vmatprep.subr.mxu0 0.0
    %657 = vmatpush2.xpose.msra.mxu0 0.0
    %658 = vmatprep.subr.mxu0 0.0
    %659 = vmatpush2.xpose.msra.mxu0 0.0
    %660 = vmatprep.subr.mxu0 0.0
    %661 = vmatpush2.xpose.msra.mxu0 0.0
    %662 = vmatprep.subr.mxu0 0.0
    %663 = vmatpush2.xpose.msra.mxu0 0.0
    %664 = vmatprep.subr.mxu0 0.0
    %665 = vmatpush2.xpose.msra.mxu0 0.0
    %666 = vmatprep.subr.mxu0 0.0
    %667 = vmatpush2.xpose.msra.mxu0 0.0
    %668 = vmatprep.subr.mxu0 0.0
    %669 = vmatpush2.xpose.msra.mxu0 0.0
    %670 = vmatprep.subr.mxu0 0.0
    %671 = vmatpush2.xpose.msra.mxu0 0.0
    %672 = vmatprep.mubr.f32.mxu0 0.0
    %673 = vmatmul.mubr.f32.gmra.mxu0 %v604
    %v674 = vpop.f32.mrf.mxu0
    %v675 = vadd.f32 0.0, %v674
    %v676 = vpop.f32.mrf.mxu0
    %677 = vdwg.mxu0
    %v678 = vmul.f32 %v597, 0.35355338
    %v679 = vmul.f32 %v675, 0.35355338
    %v680 = vsel %vm192, %v678, -inf
    %681 = vmax.xlane.f32.xlu0 %v680
    %v682 = vpop.xlane.xlu0 %681
    %v683 = vsel %vm192, %v679, -inf
    %684 = vmax.xlane.f32.xlu0 %v683
    %v685 = vpop.xlane.xlu0 %684
    %v686 = vsub.f32 %v678, %v682
    %v687 = vsub.f32 %v679, %v685
    %v688 = vmul.f32 %v686, 1.442695
    %v689 = vpow.pop %v688
    %v690 = vmul.f32 %v687, 1.442695
    %v691 = vpow.pop %v690
    %v692 = vsel %vm192, %v689, 0.0
    %693 = vadd.xlane.f32.xlu0 %v692
    %v694 = vpop.xlane.xlu0 %693
    %v695 = vsel %vm192, %v691, 0.0
    %696 = vadd.xlane.f32.xlu0 %v695
    %v697 = vpop.xlane.xlu0 %696
    %v698 = vrcp.pop %v694
    %v699 = vrcp.pop %v697
    %v700 = vmul.f32 %v689, %v698
    %v701 = vmul.f32 %v691, %v699
    %702 = vrot.lane.b32.xlu0 %v183, 56
    %v703 = vpop.permute.xlu0 %702
    %v706 = vsel %vm192, %v700, 0
    %708 = vmatprep.subr.mxu0 0.0
    %709 = vmatpush1.msra.mxu0 0.0
    %710 = vmatprep.subr.mxu0 0.0
    %711 = vmatpush1.msra.mxu0 0.0
    %712 = vmatprep.subr.mxu0 0.0
    %713 = vmatpush1.msra.mxu0 0.0
    %714 = vmatprep.subr.mxu0 0.0
    %715 = vmatpush1.msra.mxu0 0.0
    %716 = vmatprep.subr.mxu0 0.0
    %717 = vmatpush1.msra.mxu0 0.0
    %718 = vmatprep.subr.mxu0 0.0
    %719 = vmatpush1.msra.mxu0 0.0
    %720 = vmatprep.subr.mxu0 0.0
    %721 = vmatpush1.msra.mxu0 0.0
    %722 = vmatprep.subr.mxu0 0.0
    %723 = vmatpush1.msra.mxu0 0.0
    %724 = vmatprep.subr.mxu0 0.0
    %725 = vmatpush1.msra.mxu0 0.0
    %726 = vmatprep.subr.mxu0 0.0
    %727 = vmatpush1.msra.mxu0 0.0
    %728 = vmatprep.subr.mxu0 0.0
    %729 = vmatpush1.msra.mxu0 0.0
    %730 = vmatprep.subr.mxu0 0.0
    %731 = vmatpush1.msra.mxu0 0.0
    %732 = vmatprep.subr.mxu0 0.0
    %733 = vmatpush1.msra.mxu0 0.0
    %734 = vmatprep.subr.mxu0 0.0
    %735 = vmatpush1.msra.mxu0 0.0
    %736 = vmatprep.subr.mxu0 0.0
    %737 = vmatpush1.msra.mxu0 0.0
    %738 = vmatprep.subr.mxu0 0.0
    %739 = vmatpush1.msra.mxu0 %v703
    %740 = vmatprep.subr.mxu0 0.0
    %741 = vmatpush2.msra.mxu0 0.0
    %742 = vmatprep.subr.mxu0 0.0
    %743 = vmatpush2.msra.mxu0 0.0
    %744 = vmatprep.subr.mxu0 0.0
    %745 = vmatpush2.msra.mxu0 0.0
    %746 = vmatprep.subr.mxu0 0.0
    %747 = vmatpush2.msra.mxu0 0.0
    %748 = vmatprep.subr.mxu0 0.0
    %749 = vmatpush2.msra.mxu0 0.0
    %750 = vmatprep.subr.mxu0 0.0
    %751 = vmatpush2.msra.mxu0 0.0
    %752 = vmatprep.subr.mxu0 0.0
    %753 = vmatpush2.msra.mxu0 0.0
    %754 = vmatprep.subr.mxu0 0.0
    %755 = vmatpush2.msra.mxu0 0.0
    %756 = vmatprep.subr.mxu0 0.0
    %757 = vmatpush2.msra.mxu0 0.0
    %758 = vmatprep.subr.mxu0 0.0
    %759 = vmatpush2.msra.mxu0 0.0
    %760 = vmatprep.subr.mxu0 0.0
    %761 = vmatpush2.msra.mxu0 0.0
    %762 = vmatprep.subr.mxu0 0.0
    %763 = vmatpush2.msra.mxu0 0.0
    %764 = vmatprep.subr.mxu0 0.0
    %765 = vmatpush2.msra.mxu0 0.0
    %766 = vmatprep.subr.mxu0 0.0
    %767 = vmatpush2.msra.mxu0 0.0
    %768 = vmatprep.subr.mxu0 0.0
    %769 = vmatpush2.msra.mxu0 0.0
    %770 = vmatprep.subr.mxu0 0.0
    %771 = vmatpush2.msra.mxu0 0.0
    %772 = vmatprep.mubr.f32.mxu0 0.0
    %773 = vmatmul.mubr.f32.gmra.mxu0 %v706
    %v774 = vpop.f32.mrf.mxu0
    %v775 = vadd.f32 0.0, %v774
    %v776 = vpop.f32.mrf.mxu0
    %777 = vdwg.mxu0
    %778 = vrot.lane.b32.xlu0 %v186, 56
    %v779 = vpop.permute.xlu0 %778
    %v782 = vsel %vm192, %v701, 0
    %784 = vmatprep.subr.mxu0 0.0
    %785 = vmatpush1.msra.mxu0 0.0
    %786 = vmatprep.subr.mxu0 0.0
    %787 = vmatpush1.msra.mxu0 0.0
    %788 = vmatprep.subr.mxu0 0.0
    %789 = vmatpush1.msra.mxu0 0.0
    %790 = vmatprep.subr.mxu0 0.0
    %791 = vmatpush1.msra.mxu0 0.0
    %792 = vmatprep.subr.mxu0 0.0
    %793 = vmatpush1.msra.mxu0 0.0
    %794 = vmatprep.subr.mxu0 0.0
    %795 = vmatpush1.msra.mxu0 0.0
    %796 = vmatprep.subr.mxu0 0.0
    %797 = vmatpush1.msra.mxu0 0.0
    %798 = vmatprep.subr.mxu0 0.0
    %799 = vmatpush1.msra.mxu0 0.0
    %800 = vmatprep.subr.mxu0 0.0
    %801 = vmatpush1.msra.mxu0 0.0
    %802 = vmatprep.subr.mxu0 0.0
    %803 = vmatpush1.msra.mxu0 0.0
    %804 = vmatprep.subr.mxu0 0.0
    %805 = vmatpush1.msra.mxu0 0.0
    %806 = vmatprep.subr.mxu0 0.0
    %807 = vmatpush1.msra.mxu0 0.0
    %808 = vmatprep.subr.mxu0 0.0
    %809 = vmatpush1.msra.mxu0 0.0
    %810 = vmatprep.subr.mxu0 0.0
    %811 = vmatpush1.msra.mxu0 0.0
    %812 = vmatprep.subr.mxu0 0.0
    %813 = vmatpush1.msra.mxu0 0.0
    %814 = vmatprep.subr.mxu0 0.0
    %815 = vmatpush1.msra.mxu0 %v779
    %816 = vmatprep.subr.mxu0 0.0
    %817 = vmatpush2.msra.mxu0 0.0
    %818 = vmatprep.subr.mxu0 0.0
    %819 = vmatpush2.msra.mxu0 0.0
    %820 = vmatprep.subr.mxu0 0.0
    %821 = vmatpush2.msra.mxu0 0.0
    %822 = vmatprep.subr.mxu0 0.0
    %823 = vmatpush2.msra.mxu0 0.0
    %824 = vmatprep.subr.mxu0 0.0
    %825 = vmatpush2.msra.mxu0 0.0
    %826 = vmatprep.subr.mxu0 0.0
    %827 = vmatpush2.msra.mxu0 0.0
    %828 = vmatprep.subr.mxu0 0.0
    %829 = vmatpush2.msra.mxu0 0.0
    %830 = vmatprep.subr.mxu0 0.0
    %831 = vmatpush2.msra.mxu0 0.0
    %832 = vmatprep.subr.mxu0 0.0
    %833 = vmatpush2.msra.mxu0 0.0
    %834 = vmatprep.subr.mxu0 0.0
    %835 = vmatpush2.msra.mxu0 0.0
    %836 = vmatprep.subr.mxu0 0.0
    %837 = vmatpush2.msra.mxu0 0.0
    %838 = vmatprep.subr.mxu0 0.0
    %839 = vmatpush2.msra.mxu0 0.0
    %840 = vmatprep.subr.mxu0 0.0
    %841 = vmatpush2.msra.mxu0 0.0
    %842 = vmatprep.subr.mxu0 0.0
    %843 = vmatpush2.msra.mxu0 0.0
    %844 = vmatprep.subr.mxu0 0.0
    %845 = vmatpush2.msra.mxu0 0.0
    %846 = vmatprep.subr.mxu0 0.0
    %847 = vmatpush2.msra.mxu0 0.0
    %848 = vmatprep.mubr.f32.mxu0 0.0
    %849 = vmatmul.mubr.f32.gmra.mxu0 %v782
    %v850 = vpop.f32.mrf.mxu0
    %v851 = vadd.f32 0.0, %v850
    %v852 = vpop.f32.mrf.mxu0
    %853 = vdwg.mxu0
    %856 = vrot.lane.b32.xlu0 %v775, 8
    %v857 = vpop.permute.xlu0 %856
    %858 = vrot.lane.b32.xlu0 %v851, 8
    %v859 = vpop.permute.xlu0 %858
    %vm862 = vcmask 130112
    %863 = vst.msk [vmem:[#allocation2] sm:$0xff] %vm862, %v857
    %864 = vst.msk [vmem:[#allocation2 + $0x8] sm:$0xff] %vm862, %v859
    %865 = vrot.lane.b32.xlu0 %v183, 112
    %v866 = vpop.permute.xlu0 %865
    %867 = vrot.lane.b32.xlu0 %v183, 80
    %v868 = vpop.permute.xlu0 %867
    %v869 = vsel %vm192, %v866, 0
    %v871 = vsel %vm192, %v868, 0
    %873 = vmatprep.subr.mxu0 0.0
    %874 = vmatpush1.xpose.msra.mxu0 0.0
    %875 = vmatprep.subr.mxu0 0.0
    %876 = vmatpush1.xpose.msra.mxu0 0.0
    %877 = vmatprep.subr.mxu0 0.0
    %878 = vmatpush1.xpose.msra.mxu0 0.0
    %879 = vmatprep.subr.mxu0 0.0
    %880 = vmatpush1.xpose.msra.mxu0 0.0
    %881 = vmatprep.subr.mxu0 0.0
    %882 = vmatpush1.xpose.msra.mxu0 0.0
    %883 = vmatprep.subr.mxu0 0.0
    %884 = vmatpush1.xpose.msra.mxu0 0.0
    %885 = vmatprep.subr.mxu0 0.0
    %886 = vmatpush1.xpose.msra.mxu0 0.0
    %887 = vmatprep.subr.mxu0 0.0
    %888 = vmatpush1.xpose.msra.mxu0 0.0
    %889 = vmatprep.subr.mxu0 0.0
    %890 = vmatpush1.xpose.msra.mxu0 0.0
    %891 = vmatprep.subr.mxu0 0.0
    %892 = vmatpush1.xpose.msra.mxu0 0.0
    %893 = vmatprep.subr.mxu0 0.0
    %894 = vmatpush1.xpose.msra.mxu0 0.0
    %895 = vmatprep.subr.mxu0 0.0
    %896 = vmatpush1.xpose.msra.mxu0 0.0
    %897 = vmatprep.subr.mxu0 0.0
    %898 = vmatpush1.xpose.msra.mxu0 0.0
    %899 = vmatprep.subr.mxu0 0.0
    %900 = vmatpush1.xpose.msra.mxu0 0.0
    %901 = vmatprep.subr.mxu0 0.0
    %902 = vmatpush1.xpose.msra.mxu0 0.0
    %903 = vmatprep.subr.mxu0 0.0
    %904 = vmatpush1.xpose.msra.mxu0 %v871
    %905 = vmatprep.subr.mxu0 0.0
    %906 = vmatpush2.xpose.msra.mxu0 0.0
    %907 = vmatprep.subr.mxu0 0.0
    %908 = vmatpush2.xpose.msra.mxu0 0.0
    %909 = vmatprep.subr.mxu0 0.0
    %910 = vmatpush2.xpose.msra.mxu0 0.0
    %911 = vmatprep.subr.mxu0 0.0
    %912 = vmatpush2.xpose.msra.mxu0 0.0
    %913 = vmatprep.subr.mxu0 0.0
    %914 = vmatpush2.xpose.msra.mxu0 0.0
    %915 = vmatprep.subr.mxu0 0.0
    %916 = vmatpush2.xpose.msra.mxu0 0.0
    %917 = vmatprep.subr.mxu0 0.0
    %918 = vmatpush2.xpose.msra.mxu0 0.0
    %919 = vmatprep.subr.mxu0 0.0
    %920 = vmatpush2.xpose.msra.mxu0 0.0
    %921 = vmatprep.subr.mxu0 0.0
    %922 = vmatpush2.xpose.msra.mxu0 0.0
    %923 = vmatprep.subr.mxu0 0.0
    %924 = vmatpush2.xpose.msra.mxu0 0.0
    %925 = vmatprep.subr.mxu0 0.0
    %926 = vmatpush2.xpose.msra.mxu0 0.0
    %927 = vmatprep.subr.mxu0 0.0
    %928 = vmatpush2.xpose.msra.mxu0 0.0
    %929 = vmatprep.subr.mxu0 0.0
    %930 = vmatpush2.xpose.msra.mxu0 0.0
    %931 = vmatprep.subr.mxu0 0.0
    %932 = vmatpush2.xpose.msra.mxu0 0.0
    %933 = vmatprep.subr.mxu0 0.0
    %934 = vmatpush2.xpose.msra.mxu0 0.0
    %935 = vmatprep.subr.mxu0 0.0
    %936 = vmatpush2.xpose.msra.mxu0 0.0
    %937 = vmatprep.mubr.f32.mxu0 0.0
    %938 = vmatmul.mubr.f32.gmra.mxu0 %v869
    %v939 = vpop.f32.mrf.mxu0
    %v940 = vadd.f32 0.0, %v939
    %v941 = vpop.f32.mrf.mxu0
    %942 = vdwg.mxu0
    %943 = vrot.lane.b32.xlu0 %v186, 112
    %v944 = vpop.permute.xlu0 %943
    %945 = vrot.lane.b32.xlu0 %v186, 80
    %v946 = vpop.permute.xlu0 %945
    %v947 = vsel %vm192, %v944, 0
    %v949 = vsel %vm192, %v946, 0
    %951 = vmatprep.subr.mxu0 0.0
    %952 = vmatpush1.xpose.msra.mxu0 0.0
    %953 = vmatprep.subr.mxu0 0.0
    %954 = vmatpush1.xpose.msra.mxu0 0.0
    %955 = vmatprep.subr.mxu0 0.0
    %956 = vmatpush1.xpose.msra.mxu0 0.0
    %957 = vmatprep.subr.mxu0 0.0
    %958 = vmatpush1.xpose.msra.mxu0 0.0
    %959 = vmatprep.subr.mxu0 0.0
    %960 = vmatpush1.xpose.msra.mxu0 0.0
    %961 = vmatprep.subr.mxu0 0.0
    %962 = vmatpush1.xpose.msra.mxu0 0.0
    %963 = vmatprep.subr.mxu0 0.0
    %964 = vmatpush1.xpose.msra.mxu0 0.0
    %965 = vmatprep.subr.mxu0 0.0
    %966 = vmatpush1.xpose.msra.mxu0 0.0
    %967 = vmatprep.subr.mxu0 0.0
    %968 = vmatpush1.xpose.msra.mxu0 0.0
    %969 = vmatprep.subr.mxu0 0.0
    %970 = vmatpush1.xpose.msra.mxu0 0.0
    %971 = vmatprep.subr.mxu0 0.0
    %972 = vmatpush1.xpose.msra.mxu0 0.0
    %973 = vmatprep.subr.mxu0 0.0
    %974 = vmatpush1.xpose.msra.mxu0 0.0
    %975 = vmatprep.subr.mxu0 0.0
    %976 = vmatpush1.xpose.msra.mxu0 0.0
    %977 = vmatprep.subr.mxu0 0.0
    %978 = vmatpush1.xpose.msra.mxu0 0.0
    %979 = vmatprep.subr.mxu0 0.0
    %980 = vmatpush1.xpose.msra.mxu0 0.0
    %981 = vmatprep.subr.mxu0 0.0
    %982 = vmatpush1.xpose.msra.mxu0 %v949
    %983 = vmatprep.subr.mxu0 0.0
    %984 = vmatpush2.xpose.msra.mxu0 0.0
    %985 = vmatprep.subr.mxu0 0.0
    %986 = vmatpush2.xpose.msra.mxu0 0.0
    %987 = vmatprep.subr.mxu0 0.0
    %988 = vmatpush2.xpose.msra.mxu0 0.0
    %989 = vmatprep.subr.mxu0 0.0
    %990 = vmatpush2.xpose.msra.mxu0 0.0
    %991 = vmatprep.subr.mxu0 0.0
    %992 = vmatpush2.xpose.msra.mxu0 0.0
    %993 = vmatprep.subr.mxu0 0.0
    %994 = vmatpush2.xpose.msra.mxu0 0.0
    %995 = vmatprep.subr.mxu0 0.0
    %996 = vmatpush2.xpose.msra.mxu0 0.0
    %997 = vmatprep.subr.mxu0 0.0
    %998 = vmatpush2.xpose.msra.mxu0 0.0
    %999 = vmatprep.subr.mxu0 0.0
    %1000 = vmatpush2.xpose.msra.mxu0 0.0
    %1001 = vmatprep.subr.mxu0 0.0
    %1002 = vmatpush2.xpose.msra.mxu0 0.0
    %1003 = vmatprep.subr.mxu0 0.0
    %1004 = vmatpush2.xpose.msra.mxu0 0.0
    %1005 = vmatprep.subr.mxu0 0.0
    %1006 = vmatpush2.xpose.msra.mxu0 0.0
    %1007 = vmatprep.subr.mxu0 0.0
    %1008 = vmatpush2.xpose.msra.mxu0 0.0
    %1009 = vmatprep.subr.mxu0 0.0
    %1010 = vmatpush2.xpose.msra.mxu0 0.0
    %1011 = vmatprep.subr.mxu0 0.0
    %1012 = vmatpush2.xpose.msra.mxu0 0.0
    %1013 = vmatprep.subr.mxu0 0.0
    %1014 = vmatpush2.xpose.msra.mxu0 0.0
    %1015 = vmatprep.mubr.f32.mxu0 0.0
    %1016 = vmatmul.mubr.f32.gmra.mxu0 %v947
    %v1017 = vpop.f32.mrf.mxu0
    %v1018 = vadd.f32 0.0, %v1017
    %v1019 = vpop.f32.mrf.mxu0
    %1020 = vdwg.mxu0
    %v1021 = vmul.f32 %v940, 0.35355338
    %v1022 = vmul.f32 %v1018, 0.35355338
    %v1023 = vsel %vm192, %v1021, -inf
    %1024 = vmax.xlane.f32.xlu0 %v1023
    %v1025 = vpop.xlane.xlu0 %1024
    %v1026 = vsel %vm192, %v1022, -inf
    %1027 = vmax.xlane.f32.xlu0 %v1026
    %v1028 = vpop.xlane.xlu0 %1027
    %v1029 = vsub.f32 %v1021, %v1025
    %v1030 = vsub.f32 %v1022, %v1028
    %v1031 = vmul.f32 %v1029, 1.442695
    %v1032 = vpow.pop %v1031
    %v1033 = vmul.f32 %v1030, 1.442695
    %v1034 = vpow.pop %v1033
    %v1035 = vsel %vm192, %v1032, 0.0
    %1036 = vadd.xlane.f32.xlu0 %v1035
    %v1037 = vpop.xlane.xlu0 %1036
    %v1038 = vsel %vm192, %v1034, 0.0
    %1039 = vadd.xlane.f32.xlu0 %v1038
    %v1040 = vpop.xlane.xlu0 %1039
    %v1041 = vrcp.pop %v1037
    %v1042 = vrcp.pop %v1040
    %v1043 = vmul.f32 %v1032, %v1041
    %v1044 = vmul.f32 %v1034, %v1042
    %1045 = vrot.lane.b32.xlu0 %v183, 48
    %v1046 = vpop.permute.xlu0 %1045
    %v1049 = vsel %vm192, %v1043, 0
    %1051 = vmatprep.subr.mxu0 0.0
    %1052 = vmatpush1.msra.mxu0 0.0
    %1053 = vmatprep.subr.mxu0 0.0
    %1054 = vmatpush1.msra.mxu0 0.0
    %1055 = vmatprep.subr.mxu0 0.0
    %1056 = vmatpush1.msra.mxu0 0.0
    %1057 = vmatprep.subr.mxu0 0.0
    %1058 = vmatpush1.msra.mxu0 0.0
    %1059 = vmatprep.subr.mxu0 0.0
    %1060 = vmatpush1.msra.mxu0 0.0
    %1061 = vmatprep.subr.mxu0 0.0
    %1062 = vmatpush1.msra.mxu0 0.0
    %1063 = vmatprep.subr.mxu0 0.0
    %1064 = vmatpush1.msra.mxu0 0.0
    %1065 = vmatprep.subr.mxu0 0.0
    %1066 = vmatpush1.msra.mxu0 0.0
    %1067 = vmatprep.subr.mxu0 0.0
    %1068 = vmatpush1.msra.mxu0 0.0
    %1069 = vmatprep.subr.mxu0 0.0
    %1070 = vmatpush1.msra.mxu0 0.0
    %1071 = vmatprep.subr.mxu0 0.0
    %1072 = vmatpush1.msra.mxu0 0.0
    %1073 = vmatprep.subr.mxu0 0.0
    %1074 = vmatpush1.msra.mxu0 0.0
    %1075 = vmatprep.subr.mxu0 0.0
    %1076 = vmatpush1.msra.mxu0 0.0
    %1077 = vmatprep.subr.mxu0 0.0
    %1078 = vmatpush1.msra.mxu0 0.0
    %1079 = vmatprep.subr.mxu0 0.0
    %1080 = vmatpush1.msra.mxu0 0.0
    %1081 = vmatprep.subr.mxu0 0.0
    %1082 = vmatpush1.msra.mxu0 %v1046
    %1083 = vmatprep.subr.mxu0 0.0
    %1084 = vmatpush2.msra.mxu0 0.0
    %1085 = vmatprep.subr.mxu0 0.0
    %1086 = vmatpush2.msra.mxu0 0.0
    %1087 = vmatprep.subr.mxu0 0.0
    %1088 = vmatpush2.msra.mxu0 0.0
    %1089 = vmatprep.subr.mxu0 0.0
    %1090 = vmatpush2.msra.mxu0 0.0
    %1091 = vmatprep.subr.mxu0 0.0
    %1092 = vmatpush2.msra.mxu0 0.0
    %1093 = vmatprep.subr.mxu0 0.0
    %1094 = vmatpush2.msra.mxu0 0.0
    %1095 = vmatprep.subr.mxu0 0.0
    %1096 = vmatpush2.msra.mxu0 0.0
    %1097 = vmatprep.subr.mxu0 0.0
    %1098 = vmatpush2.msra.mxu0 0.0
    %1099 = vmatprep.subr.mxu0 0.0
    %1100 = vmatpush2.msra.mxu0 0.0
    %1101 = vmatprep.subr.mxu0 0.0
    %1102 = vmatpush2.msra.mxu0 0.0
    %1103 = vmatprep.subr.mxu0 0.0
    %1104 = vmatpush2.msra.mxu0 0.0
    %1105 = vmatprep.subr.mxu0 0.0
    %1106 = vmatpush2.msra.mxu0 0.0
    %1107 = vmatprep.subr.mxu0 0.0
    %1108 = vmatpush2.msra.mxu0 0.0
    %1109 = vmatprep.subr.mxu0 0.0
    %1110 = vmatpush2.msra.mxu0 0.0
    %1111 = vmatprep.subr.mxu0 0.0
    %1112 = vmatpush2.msra.mxu0 0.0
    %1113 = vmatprep.subr.mxu0 0.0
    %1114 = vmatpush2.msra.mxu0 0.0
    %1115 = vmatprep.mubr.f32.mxu0 0.0
    %1116 = vmatmul.mubr.f32.gmra.mxu0 %v1049
    %v1117 = vpop.f32.mrf.mxu0
    %v1118 = vadd.f32 0.0, %v1117
    %v1119 = vpop.f32.mrf.mxu0
    %1120 = vdwg.mxu0
    %1121 = vrot.lane.b32.xlu0 %v186, 48
    %v1122 = vpop.permute.xlu0 %1121
    %v1125 = vsel %vm192, %v1044, 0
    %1127 = vmatprep.subr.mxu0 0.0
    %1128 = vmatpush1.msra.mxu0 0.0
    %1129 = vmatprep.subr.mxu0 0.0
    %1130 = vmatpush1.msra.mxu0 0.0
    %1131 = vmatprep.subr.mxu0 0.0
    %1132 = vmatpush1.msra.mxu0 0.0
    %1133 = vmatprep.subr.mxu0 0.0
    %1134 = vmatpush1.msra.mxu0 0.0
    %1135 = vmatprep.subr.mxu0 0.0
    %1136 = vmatpush1.msra.mxu0 0.0
    %1137 = vmatprep.subr.mxu0 0.0
    %1138 = vmatpush1.msra.mxu0 0.0
    %1139 = vmatprep.subr.mxu0 0.0
    %1140 = vmatpush1.msra.mxu0 0.0
    %1141 = vmatprep.subr.mxu0 0.0
    %1142 = vmatpush1.msra.mxu0 0.0
    %1143 = vmatprep.subr.mxu0 0.0
    %1144 = vmatpush1.msra.mxu0 0.0
    %1145 = vmatprep.subr.mxu0 0.0
    %1146 = vmatpush1.msra.mxu0 0.0
    %1147 = vmatprep.subr.mxu0 0.0
    %1148 = vmatpush1.msra.mxu0 0.0
    %1149 = vmatprep.subr.mxu0 0.0
    %1150 = vmatpush1.msra.mxu0 0.0
    %1151 = vmatprep.subr.mxu0 0.0
    %1152 = vmatpush1.msra.mxu0 0.0
    %1153 = vmatprep.subr.mxu0 0.0
    %1154 = vmatpush1.msra.mxu0 0.0
    %1155 = vmatprep.subr.mxu0 0.0
    %1156 = vmatpush1.msra.mxu0 0.0
    %1157 = vmatprep.subr.mxu0 0.0
    %1158 = vmatpush1.msra.mxu0 %v1122
    %1159 = vmatprep.subr.mxu0 0.0
    %1160 = vmatpush2.msra.mxu0 0.0
    %1161 = vmatprep.subr.mxu0 0.0
    %1162 = vmatpush2.msra.mxu0 0.0
    %1163 = vmatprep.subr.mxu0 0.0
    %1164 = vmatpush2.msra.mxu0 0.0
    %1165 = vmatprep.subr.mxu0 0.0
    %1166 = vmatpush2.msra.mxu0 0.0
    %1167 = vmatprep.subr.mxu0 0.0
    %1168 = vmatpush2.msra.mxu0 0.0
    %1169 = vmatprep.subr.mxu0 0.0
    %1170 = vmatpush2.msra.mxu0 0.0
    %1171 = vmatprep.subr.mxu0 0.0
    %1172 = vmatpush2.msra.mxu0 0.0
    %1173 = vmatprep.subr.mxu0 0.0
    %1174 = vmatpush2.msra.mxu0 0.0
    %1175 = vmatprep.subr.mxu0 0.0
    %1176 = vmatpush2.msra.mxu0 0.0
    %1177 = vmatprep.subr.mxu0 0.0
    %1178 = vmatpush2.msra.mxu0 0.0
    %1179 = vmatprep.subr.mxu0 0.0
    %1180 = vmatpush2.msra.mxu0 0.0
    %1181 = vmatprep.subr.mxu0 0.0
    %1182 = vmatpush2.msra.mxu0 0.0
    %1183 = vmatprep.subr.mxu0 0.0
    %1184 = vmatpush2.msra.mxu0 0.0
    %1185 = vmatprep.subr.mxu0 0.0
    %1186 = vmatpush2.msra.mxu0 0.0
    %1187 = vmatprep.subr.mxu0 0.0
    %1188 = vmatpush2.msra.mxu0 0.0
    %1189 = vmatprep.subr.mxu0 0.0
    %1190 = vmatpush2.msra.mxu0 0.0
    %1191 = vmatprep.mubr.f32.mxu0 0.0
    %1192 = vmatmul.mubr.f32.gmra.mxu0 %v1125
    %v1193 = vpop.f32.mrf.mxu0
    %v1194 = vadd.f32 0.0, %v1193
    %v1195 = vpop.f32.mrf.mxu0
    %1196 = vdwg.mxu0
    %1199 = vrot.lane.b32.xlu0 %v1118, 16
    %v1200 = vpop.permute.xlu0 %1199
    %1201 = vrot.lane.b32.xlu0 %v1194, 16
    %v1202 = vpop.permute.xlu0 %1201
    %vm1205 = vcmask 195712
    %1206 = vst.msk [vmem:[#allocation2] sm:$0xff] %vm1205, %v1200
    %1207 = vst.msk [vmem:[#allocation2 + $0x8] sm:$0xff] %vm1205, %v1202
    %1208 = vrot.lane.b32.xlu0 %v183, 104
    %v1209 = vpop.permute.xlu0 %1208
    %1210 = vrot.lane.b32.xlu0 %v183, 72
    %v1211 = vpop.permute.xlu0 %1210
    %v1212 = vsel %vm192, %v1209, 0
    %v1214 = vsel %vm192, %v1211, 0
    %1216 = vmatprep.subr.mxu0 0.0
    %1217 = vmatpush1.xpose.msra.mxu0 0.0
    %1218 = vmatprep.subr.mxu0 0.0
    %1219 = vmatpush1.xpose.msra.mxu0 0.0
    %1220 = vmatprep.subr.mxu0 0.0
    %1221 = vmatpush1.xpose.msra.mxu0 0.0
    %1222 = vmatprep.subr.mxu0 0.0
    %1223 = vmatpush1.xpose.msra.mxu0 0.0
    %1224 = vmatprep.subr.mxu0 0.0
    %1225 = vmatpush1.xpose.msra.mxu0 0.0
    %1226 = vmatprep.subr.mxu0 0.0
    %1227 = vmatpush1.xpose.msra.mxu0 0.0
    %1228 = vmatprep.subr.mxu0 0.0
    %1229 = vmatpush1.xpose.msra.mxu0 0.0
    %1230 = vmatprep.subr.mxu0 0.0
    %1231 = vmatpush1.xpose.msra.mxu0 0.0
    %1232 = vmatprep.subr.mxu0 0.0
    %1233 = vmatpush1.xpose.msra.mxu0 0.0
    %1234 = vmatprep.subr.mxu0 0.0
    %1235 = vmatpush1.xpose.msra.mxu0 0.0
    %1236 = vmatprep.subr.mxu0 0.0
    %1237 = vmatpush1.xpose.msra.mxu0 0.0
    %1238 = vmatprep.subr.mxu0 0.0
    %1239 = vmatpush1.xpose.msra.mxu0 0.0
    %1240 = vmatprep.subr.mxu0 0.0
    %1241 = vmatpush1.xpose.msra.mxu0 0.0
    %1242 = vmatprep.subr.mxu0 0.0
    %1243 = vmatpush1.xpose.msra.mxu0 0.0
    %1244 = vmatprep.subr.mxu0 0.0
    %1245 = vmatpush1.xpose.msra.mxu0 0.0
    %1246 = vmatprep.subr.mxu0 0.0
    %1247 = vmatpush1.xpose.msra.mxu0 %v1214
    %1248 = vmatprep.subr.mxu0 0.0
    %1249 = vmatpush2.xpose.msra.mxu0 0.0
    %1250 = vmatprep.subr.mxu0 0.0
    %1251 = vmatpush2.xpose.msra.mxu0 0.0
    %1252 = vmatprep.subr.mxu0 0.0
    %1253 = vmatpush2.xpose.msra.mxu0 0.0
    %1254 = vmatprep.subr.mxu0 0.0
    %1255 = vmatpush2.xpose.msra.mxu0 0.0
    %1256 = vmatprep.subr.mxu0 0.0
    %1257 = vmatpush2.xpose.msra.mxu0 0.0
    %1258 = vmatprep.subr.mxu0 0.0
    %1259 = vmatpush2.xpose.msra.mxu0 0.0
    %1260 = vmatprep.subr.mxu0 0.0
    %1261 = vmatpush2.xpose.msra.mxu0 0.0
    %1262 = vmatprep.subr.mxu0 0.0
    %1263 = vmatpush2.xpose.msra.mxu0 0.0
    %1264 = vmatprep.subr.mxu0 0.0
    %1265 = vmatpush2.xpose.msra.mxu0 0.0
    %1266 = vmatprep.subr.mxu0 0.0
    %1267 = vmatpush2.xpose.msra.mxu0 0.0
    %1268 = vmatprep.subr.mxu0 0.0
    %1269 = vmatpush2.xpose.msra.mxu0 0.0
    %1270 = vmatprep.subr.mxu0 0.0
    %1271 = vmatpush2.xpose.msra.mxu0 0.0
    %1272 = vmatprep.subr.mxu0 0.0
    %1273 = vmatpush2.xpose.msra.mxu0 0.0
    %1274 = vmatprep.subr.mxu0 0.0
    %1275 = vmatpush2.xpose.msra.mxu0 0.0
    %1276 = vmatprep.subr.mxu0 0.0
    %1277 = vmatpush2.xpose.msra.mxu0 0.0
    %1278 = vmatprep.subr.mxu0 0.0
    %1279 = vmatpush2.xpose.msra.mxu0 0.0
    %1280 = vmatprep.mubr.f32.mxu0 0.0
    %1281 = vmatmul.mubr.f32.gmra.mxu0 %v1212
    %v1282 = vpop.f32.mrf.mxu0
    %v1283 = vadd.f32 0.0, %v1282
    %v1284 = vpop.f32.mrf.mxu0
    %1285 = vdwg.mxu0
    %1286 = vrot.lane.b32.xlu0 %v186, 104
    %v1287 = vpop.permute.xlu0 %1286
    %1288 = vrot.lane.b32.xlu0 %v186, 72
    %v1289 = vpop.permute.xlu0 %1288
    %v1290 = vsel %vm192, %v1287, 0
    %v1292 = vsel %vm192, %v1289, 0
    %1294 = vmatprep.subr.mxu0 0.0
    %1295 = vmatpush1.xpose.msra.mxu0 0.0
    %1296 = vmatprep.subr.mxu0 0.0
    %1297 = vmatpush1.xpose.msra.mxu0 0.0
    %1298 = vmatprep.subr.mxu0 0.0
    %1299 = vmatpush1.xpose.msra.mxu0 0.0
    %1300 = vmatprep.subr.mxu0 0.0
    %1301 = vmatpush1.xpose.msra.mxu0 0.0
    %1302 = vmatprep.subr.mxu0 0.0
    %1303 = vmatpush1.xpose.msra.mxu0 0.0
    %1304 = vmatprep.subr.mxu0 0.0
    %1305 = vmatpush1.xpose.msra.mxu0 0.0
    %1306 = vmatprep.subr.mxu0 0.0
    %1307 = vmatpush1.xpose.msra.mxu0 0.0
    %1308 = vmatprep.subr.mxu0 0.0
    %1309 = vmatpush1.xpose.msra.mxu0 0.0
    %1310 = vmatprep.subr.mxu0 0.0
    %1311 = vmatpush1.xpose.msra.mxu0 0.0
    %1312 = vmatprep.subr.mxu0 0.0
    %1313 = vmatpush1.xpose.msra.mxu0 0.0
    %1314 = vmatprep.subr.mxu0 0.0
    %1315 = vmatpush1.xpose.msra.mxu0 0.0
    %1316 = vmatprep.subr.mxu0 0.0
    %1317 = vmatpush1.xpose.msra.mxu0 0.0
    %1318 = vmatprep.subr.mxu0 0.0
    %1319 = vmatpush1.xpose.msra.mxu0 0.0
    %1320 = vmatprep.subr.mxu0 0.0
    %1321 = vmatpush1.xpose.msra.mxu0 0.0
    %1322 = vmatprep.subr.mxu0 0.0
    %1323 = vmatpush1.xpose.msra.mxu0 0.0
    %1324 = vmatprep.subr.mxu0 0.0
    %1325 = vmatpush1.xpose.msra.mxu0 %v1292
    %1326 = vmatprep.subr.mxu0 0.0
    %1327 = vmatpush2.xpose.msra.mxu0 0.0
    %1328 = vmatprep.subr.mxu0 0.0
    %1329 = vmatpush2.xpose.msra.mxu0 0.0
    %1330 = vmatprep.subr.mxu0 0.0
    %1331 = vmatpush2.xpose.msra.mxu0 0.0
    %1332 = vmatprep.subr.mxu0 0.0
    %1333 = vmatpush2.xpose.msra.mxu0 0.0
    %1334 = vmatprep.subr.mxu0 0.0
    %1335 = vmatpush2.xpose.msra.mxu0 0.0
    %1336 = vmatprep.subr.mxu0 0.0
    %1337 = vmatpush2.xpose.msra.mxu0 0.0
    %1338 = vmatprep.subr.mxu0 0.0
    %1339 = vmatpush2.xpose.msra.mxu0 0.0
    %1340 = vmatprep.subr.mxu0 0.0
    %1341 = vmatpush2.xpose.msra.mxu0 0.0
    %1342 = vmatprep.subr.mxu0 0.0
    %1343 = vmatpush2.xpose.msra.mxu0 0.0
    %1344 = vmatprep.subr.mxu0 0.0
    %1345 = vmatpush2.xpose.msra.mxu0 0.0
    %1346 = vmatprep.subr.mxu0 0.0
    %1347 = vmatpush2.xpose.msra.mxu0 0.0
    %1348 = vmatprep.subr.mxu0 0.0
    %1349 = vmatpush2.xpose.msra.mxu0 0.0
    %1350 = vmatprep.subr.mxu0 0.0
    %1351 = vmatpush2.xpose.msra.mxu0 0.0
    %1352 = vmatprep.subr.mxu0 0.0
    %1353 = vmatpush2.xpose.msra.mxu0 0.0
    %1354 = vmatprep.subr.mxu0 0.0
    %1355 = vmatpush2.xpose.msra.mxu0 0.0
    %1356 = vmatprep.subr.mxu0 0.0
    %1357 = vmatpush2.xpose.msra.mxu0 0.0
    %1358 = vmatprep.mubr.f32.mxu0 0.0
    %1359 = vmatmul.mubr.f32.gmra.mxu0 %v1290
    %v1360 = vpop.f32.mrf.mxu0
    %v1361 = vadd.f32 0.0, %v1360
    %v1362 = vpop.f32.mrf.mxu0
    %1363 = vdwg.mxu0
    %v1364 = vmul.f32 %v1283, 0.35355338
    %v1365 = vmul.f32 %v1361, 0.35355338
    %v1366 = vsel %vm192, %v1364, -inf
    %1367 = vmax.xlane.f32.xlu0 %v1366
    %v1368 = vpop.xlane.xlu0 %1367
    %v1369 = vsel %vm192, %v1365, -inf
    %1370 = vmax.xlane.f32.xlu0 %v1369
    %v1371 = vpop.xlane.xlu0 %1370
    %v1372 = vsub.f32 %v1364, %v1368
    %v1373 = vsub.f32 %v1365, %v1371
    %v1374 = vmul.f32 %v1372, 1.442695
    %v1375 = vpow.pop %v1374
    %v1376 = vmul.f32 %v1373, 1.442695
    %v1377 = vpow.pop %v1376
    %v1378 = vsel %vm192, %v1375, 0.0
    %1379 = vadd.xlane.f32.xlu0 %v1378
    %v1380 = vpop.xlane.xlu0 %1379
    %v1381 = vsel %vm192, %v1377, 0.0
    %1382 = vadd.xlane.f32.xlu0 %v1381
    %v1383 = vpop.xlane.xlu0 %1382
    %v1384 = vrcp.pop %v1380
    %v1385 = vrcp.pop %v1383
    %v1386 = vmul.f32 %v1375, %v1384
    %v1387 = vmul.f32 %v1377, %v1385
    %1388 = vrot.lane.b32.xlu0 %v183, 40
    %v1389 = vpop.permute.xlu0 %1388
    %v1392 = vsel %vm192, %v1386, 0
    %1394 = vmatprep.subr.mxu0 0.0
    %1395 = vmatpush1.msra.mxu0 0.0
    %1396 = vmatprep.subr.mxu0 0.0
    %1397 = vmatpush1.msra.mxu0 0.0
    %1398 = vmatprep.subr.mxu0 0.0
    %1399 = vmatpush1.msra.mxu0 0.0
    %1400 = vmatprep.subr.mxu0 0.0
    %1401 = vmatpush1.msra.mxu0 0.0
    %1402 = vmatprep.subr.mxu0 0.0
    %1403 = vmatpush1.msra.mxu0 0.0
    %1404 = vmatprep.subr.mxu0 0.0
    %1405 = vmatpush1.msra.mxu0 0.0
    %1406 = vmatprep.subr.mxu0 0.0
    %1407 = vmatpush1.msra.mxu0 0.0
    %1408 = vmatprep.subr.mxu0 0.0
    %1409 = vmatpush1.msra.mxu0 0.0
    %1410 = vmatprep.subr.mxu0 0.0
    %1411 = vmatpush1.msra.mxu0 0.0
    %1412 = vmatprep.subr.mxu0 0.0
    %1413 = vmatpush1.msra.mxu0 0.0
    %1414 = vmatprep.subr.mxu0 0.0
    %1415 = vmatpush1.msra.mxu0 0.0
    %1416 = vmatprep.subr.mxu0 0.0
    %1417 = vmatpush1.msra.mxu0 0.0
    %1418 = vmatprep.subr.mxu0 0.0
    %1419 = vmatpush1.msra.mxu0 0.0
    %1420 = vmatprep.subr.mxu0 0.0
    %1421 = vmatpush1.msra.mxu0 0.0
    %1422 = vmatprep.subr.mxu0 0.0
    %1423 = vmatpush1.msra.mxu0 0.0
    %1424 = vmatprep.subr.mxu0 0.0
    %1425 = vmatpush1.msra.mxu0 %v1389
    %1426 = vmatprep.subr.mxu0 0.0
    %1427 = vmatpush2.msra.mxu0 0.0
    %1428 = vmatprep.subr.mxu0 0.0
    %1429 = vmatpush2.msra.mxu0 0.0
    %1430 = vmatprep.subr.mxu0 0.0
    %1431 = vmatpush2.msra.mxu0 0.0
    %1432 = vmatprep.subr.mxu0 0.0
    %1433 = vmatpush2.msra.mxu0 0.0
    %1434 = vmatprep.subr.mxu0 0.0
    %1435 = vmatpush2.msra.mxu0 0.0
    %1436 = vmatprep.subr.mxu0 0.0
    %1437 = vmatpush2.msra.mxu0 0.0
    %1438 = vmatprep.subr.mxu0 0.0
    %1439 = vmatpush2.msra.mxu0 0.0
    %1440 = vmatprep.subr.mxu0 0.0
    %1441 = vmatpush2.msra.mxu0 0.0
    %1442 = vmatprep.subr.mxu0 0.0
    %1443 = vmatpush2.msra.mxu0 0.0
    %1444 = vmatprep.subr.mxu0 0.0
    %1445 = vmatpush2.msra.mxu0 0.0
    %1446 = vmatprep.subr.mxu0 0.0
    %1447 = vmatpush2.msra.mxu0 0.0
    %1448 = vmatprep.subr.mxu0 0.0
    %1449 = vmatpush2.msra.mxu0 0.0
    %1450 = vmatprep.subr.mxu0 0.0
    %1451 = vmatpush2.msra.mxu0 0.0
    %1452 = vmatprep.subr.mxu0 0.0
    %1453 = vmatpush2.msra.mxu0 0.0
    %1454 = vmatprep.subr.mxu0 0.0
    %1455 = vmatpush2.msra.mxu0 0.0
    %1456 = vmatprep.subr.mxu0 0.0
    %1457 = vmatpush2.msra.mxu0 0.0
    %1458 = vmatprep.mubr.f32.mxu0 0.0
    %1459 = vmatmul.mubr.f32.gmra.mxu0 %v1392
    %v1460 = vpop.f32.mrf.mxu0
    %v1461 = vadd.f32 0.0, %v1460
    %v1462 = vpop.f32.mrf.mxu0
    %1463 = vdwg.mxu0
    %1464 = vrot.lane.b32.xlu0 %v186, 40
    %v1465 = vpop.permute.xlu0 %1464
    %v1468 = vsel %vm192, %v1387, 0
    %1470 = vmatprep.subr.mxu0 0.0
    %1471 = vmatpush1.msra.mxu0 0.0
    %1472 = vmatprep.subr.mxu0 0.0
    %1473 = vmatpush1.msra.mxu0 0.0
    %1474 = vmatprep.subr.mxu0 0.0
    %1475 = vmatpush1.msra.mxu0 0.0
    %1476 = vmatprep.subr.mxu0 0.0
    %1477 = vmatpush1.msra.mxu0 0.0
    %1478 = vmatprep.subr.mxu0 0.0
    %1479 = vmatpush1.msra.mxu0 0.0
    %1480 = vmatprep.subr.mxu0 0.0
    %1481 = vmatpush1.msra.mxu0 0.0
    %1482 = vmatprep.subr.mxu0 0.0
    %1483 = vmatpush1.msra.mxu0 0.0
    %1484 = vmatprep.subr.mxu0 0.0
    %1485 = vmatpush1.msra.mxu0 0.0
    %1486 = vmatprep.subr.mxu0 0.0
    %1487 = vmatpush1.msra.mxu0 0.0
    %1488 = vmatprep.subr.mxu0 0.0
    %1489 = vmatpush1.msra.mxu0 0.0
    %1490 = vmatprep.subr.mxu0 0.0
    %1491 = vmatpush1.msra.mxu0 0.0
    %1492 = vmatprep.subr.mxu0 0.0
    %1493 = vmatpush1.msra.mxu0 0.0
    %1494 = vmatprep.subr.mxu0 0.0
    %1495 = vmatpush1.msra.mxu0 0.0
    %1496 = vmatprep.subr.mxu0 0.0
    %1497 = vmatpush1.msra.mxu0 0.0
    %1498 = vmatprep.subr.mxu0 0.0
    %1499 = vmatpush1.msra.mxu0 0.0
    %1500 = vmatprep.subr.mxu0 0.0
    %1501 = vmatpush1.msra.mxu0 %v1465
    %1502 = vmatprep.subr.mxu0 0.0
    %1503 = vmatpush2.msra.mxu0 0.0
    %1504 = vmatprep.subr.mxu0 0.0
    %1505 = vmatpush2.msra.mxu0 0.0
    %1506 = vmatprep.subr.mxu0 0.0
    %1507 = vmatpush2.msra.mxu0 0.0
    %1508 = vmatprep.subr.mxu0 0.0
    %1509 = vmatpush2.msra.mxu0 0.0
    %1510 = vmatprep.subr.mxu0 0.0
    %1511 = vmatpush2.msra.mxu0 0.0
    %1512 = vmatprep.subr.mxu0 0.0
    %1513 = vmatpush2.msra.mxu0 0.0
    %1514 = vmatprep.subr.mxu0 0.0
    %1515 = vmatpush2.msra.mxu0 0.0
    %1516 = vmatprep.subr.mxu0 0.0
    %1517 = vmatpush2.msra.mxu0 0.0
    %1518 = vmatprep.subr.mxu0 0.0
    %1519 = vmatpush2.msra.mxu0 0.0
    %1520 = vmatprep.subr.mxu0 0.0
    %1521 = vmatpush2.msra.mxu0 0.0
    %1522 = vmatprep.subr.mxu0 0.0
    %1523 = vmatpush2.msra.mxu0 0.0
    %1524 = vmatprep.subr.mxu0 0.0
    %1525 = vmatpush2.msra.mxu0 0.0
    %1526 = vmatprep.subr.mxu0 0.0
    %1527 = vmatpush2.msra.mxu0 0.0
    %1528 = vmatprep.subr.mxu0 0.0
    %1529 = vmatpush2.msra.mxu0 0.0
    %1530 = vmatprep.subr.mxu0 0.0
    %1531 = vmatpush2.msra.mxu0 0.0
    %1532 = vmatprep.subr.mxu0 0.0
    %1533 = vmatpush2.msra.mxu0 0.0
    %1534 = vmatprep.mubr.f32.mxu0 0.0
    %1535 = vmatmul.mubr.f32.gmra.mxu0 %v1468
    %v1536 = vpop.f32.mrf.mxu0
    %v1537 = vadd.f32 0.0, %v1536
    %v1538 = vpop.f32.mrf.mxu0
    %1539 = vdwg.mxu0
    %1542 = vrot.lane.b32.xlu0 %v1461, 24
    %v1543 = vpop.permute.xlu0 %1542
    %1544 = vrot.lane.b32.xlu0 %v1537, 24
    %v1545 = vpop.permute.xlu0 %1544
    %vm1548 = vcmask 261312
    %1549 = vst.msk [vmem:[#allocation2] sm:$0xff] %vm1548, %v1543
    %1550 = vst.msk [vmem:[#allocation2 + $0x8] sm:$0xff] %vm1548, %v1545
    %v1551 = vld [vmem:[#allocation2] sm:$0xff]
    %v1552 = vld [vmem:[#allocation2 + $0x8] sm:$0xff]
    %v1553 = vpack.c.bf16 %v1552, %v1551
    %v1554 = vld [vmem:[%s3] sm:$0xf]
    %v1555 = vld [vmem:[%s3 + $0x4] sm:$0xf]
    %v1556 = vld [vmem:[%s3 + $0x8] sm:$0xf]
    %v1557 = vld [vmem:[%s3 + $0xc] sm:$0xf]
    %v1558 = vld [vmem:[#allocation6] sm:$0x1]
    %v1560 = vlaneseq
    %v1561 = vshrl.u32 %v1560, 7
    %v1562 = vsub.s32 0, %v1561
    %v1563 = vrot.slane %v1558, %v1562
    %v1569 = vunpack.c.l.b16 %v1554
    %v1570 = vunpack.c.l.b16 %v1555
    %v1571 = vunpack.c.l.b16 %v1556
    %v1572 = vunpack.c.l.b16 %v1557
    %v1573 = vpack.c.b16 %v1570, %v1569
    %v1574 = vpack.c.b16 %v1572, %v1571
    %v1578 = vsel %vm144, %v1553, 0
    %1580 = vmatprep.subr.bf16.mxu0 0
    %1581 = vmatpush1.bf16.msra.mxu0 0
    %1582 = vmatprep.subr.bf16.mxu0 0
    %1583 = vmatpush1.bf16.msra.mxu0 0
    %1584 = vmatprep.subr.bf16.mxu0 0
    %1585 = vmatpush1.bf16.msra.mxu0 0
    %1586 = vmatprep.subr.bf16.mxu0 0
    %1587 = vmatpush1.bf16.msra.mxu0 0
    %1588 = vmatprep.subr.bf16.mxu0 0
    %1589 = vmatpush1.bf16.msra.mxu0 0
    %1590 = vmatprep.subr.bf16.mxu0 0
    %1591 = vmatpush1.bf16.msra.mxu0 0
    %1592 = vmatprep.subr.bf16.mxu0 0
    %1593 = vmatpush1.bf16.msra.mxu0 %v1574
    %1594 = vmatprep.subr.bf16.mxu0 0
    %1595 = vmatpush1.bf16.msra.mxu0 %v1573
    %1596 = vmatprep.subr.bf16.mxu0 0
    %1597 = vmatpush2.bf16.msra.mxu0 0
    %1598 = vmatprep.subr.bf16.mxu0 0
    %1599 = vmatpush2.bf16.msra.mxu0 0
    %1600 = vmatprep.subr.bf16.mxu0 0
    %1601 = vmatpush2.bf16.msra.mxu0 0
    %1602 = vmatprep.subr.bf16.mxu0 0
    %1603 = vmatpush2.bf16.msra.mxu0 0
    %1604 = vmatprep.subr.bf16.mxu0 0
    %1605 = vmatpush2.bf16.msra.mxu0 0
    %1606 = vmatprep.subr.bf16.mxu0 0
    %1607 = vmatpush2.bf16.msra.mxu0 0
    %1608 = vmatprep.subr.bf16.mxu0 0
    %1609 = vmatpush2.bf16.msra.mxu0 0
    %1610 = vmatprep.subr.bf16.mxu0 0
    %1611 = vmatpush2.bf16.msra.mxu0 0
    %1612 = vmatprep.mubr.bf16.mxu0 0
    %1613 = vmatmul.mubr.bf16.gmra.mxu0 %v1578
    %v1614 = vpop.f32.mrf.mxu0
    %v1615 = vadd.f32 %v1563, %v1614
    %v1616 = vpop.f32.mrf.mxu0
    %v1617 = vpop.f32.mrf.mxu0
    %v1618 = vadd.f32 %v1563, %v1617
    %v1619 = vpop.f32.mrf.mxu0
    %1620 = vdwg.mxu0
    %v1621 = vadd.f32 %v118, %v1615
    %v1622 = vadd.f32 %v119, %v1618
    %v1623 = vsel %vm144, %v1621, 0.0
    %1624 = vadd.xlane.f32.xlu0 %v1623
    %v1625 = vpop.xlane.xlu0 %1624
    %v1626 = vsel %vm144, %v1622, 0.0
    %1627 = vadd.xlane.f32.xlu0 %v1626
    %v1628 = vpop.xlane.xlu0 %1627
    %v1629 = vrcp.pop 32.0
    %v1630 = vmul.f32 %v1625, %v1629
    %v1631 = vmul.f32 %v1628, %v1629
    %v1632 = vmul.f32 %v1621, %v1621
    %v1633 = vmul.f32 %v1622, %v1622
    %v1634 = vsel %vm144, %v1632, 0.0
    %1635 = vadd.xlane.f32.xlu0 %v1634
    %v1636 = vpop.xlane.xlu0 %1635
    %v1637 = vsel %vm144, %v1633, 0.0
    %1638 = vadd.xlane.f32.xlu0 %v1637
    %v1639 = vpop.xlane.xlu0 %1638
    %v1640 = vmul.f32 %v1636, %v1629
    %v1641 = vmul.f32 %v1639, %v1629
    %v1642 = vmul.f32 %v1630, %v1630
    %v1643 = vmul.f32 %v1631, %v1631
    %v1644 = vsub.f32 %v1640, %v1642
    %v1645 = vsub.f32 %v1641, %v1643
    %v1646 = vsub.f32 %v1621, %v1630
    %v1647 = vsub.f32 %v1622, %v1631
    %v1648 = vadd.f32 %v1644, 1e-05
    %v1649 = vadd.f32 %v1645, 1e-05
    %v1650 = vrsqrt.pop %v1648
    %v1651 = vrsqrt.pop %v1649
    %v1652 = vmul.f32 %v1646, %v1650
    %v1653 = vmul.f32 %v1647, %v1651
    %v1654 = vld [vmem:[#allocation8] sm:$0x1]
    %v1656 = vlaneseq
    %v1657 = vshrl.u32 %v1656, 7
    %v1658 = vsub.s32 0, %v1657
    %v1659 = vrot.slane %v1654, %v1658
    %v1661 = vmul.f32 %v1652, %v1659
    %v1662 = vmul.f32 %v1653, %v1659
    %v1663 = vld [vmem:[#allocation9] sm:$0x1]
    %v1665 = vlaneseq
    %v1666 = vshrl.u32 %v1665, 7
    %v1667 = vsub.s32 0, %v1666
    %v1668 = vrot.slane %v1663, %v1667
    %v1670 = vadd.f32 %v1661, %v1668
    %v1671 = vadd.f32 %v1662, %v1668
    %v1672 = vpack.c.bf16 %v1671, %v1670
    %v1673 = vld [vmem:[#allocation11] sm:$0xf]
    %v1674 = vld [vmem:[#allocation11 + $0x4] sm:$0xf]
    %v1675 = vld [vmem:[#allocation11 + $0x8] sm:$0xf]
    %v1676 = vld [vmem:[#allocation11 + $0xc] sm:$0xf]
    %v1677 = vld [vmem:[#allocation12] sm:$0x1]
    %v1679 = vlaneseq
    %v1680 = vshrl.u32 %v1679, 7
    %v1681 = vsub.s32 0, %v1680
    %v1682 = vrot.slane %v1677, %v1681
    %v1688 = vunpack.c.l.b16 %v1673
    %v1689 = vunpack.c.l.b16 %v1674
    %v1690 = vunpack.c.l.b16 %v1675
    %v1691 = vunpack.c.l.b16 %v1676
    %v1692 = vpack.c.b16 %v1689, %v1688
    %v1693 = vpack.c.b16 %v1691, %v1690
    %v1697 = vsel %vm144, %v1672, 0
    %1699 = vmatprep.subr.bf16.mxu0 0
    %1700 = vmatpush1.bf16.msra.mxu0 0
    %1701 = vmatprep.subr.bf16.mxu0 0
    %1702 = vmatpush1.bf16.msra.mxu0 0
    %1703 = vmatprep.subr.bf16.mxu0 0
    %1704 = vmatpush1.bf16.msra.mxu0 0
    %1705 = vmatprep.subr.bf16.mxu0 0
    %1706 = vmatpush1.bf16.msra.mxu0 0
    %1707 = vmatprep.subr.bf16.mxu0 0
    %1708 = vmatpush1.bf16.msra.mxu0 0
    %1709 = vmatprep.subr.bf16.mxu0 0
    %1710 = vmatpush1.bf16.msra.mxu0 0
    %1711 = vmatprep.subr.bf16.mxu0 0
    %1712 = vmatpush1.bf16.msra.mxu0 %v1693
    %1713 = vmatprep.subr.bf16.mxu0 0
    %1714 = vmatpush1.bf16.msra.mxu0 %v1692
    %1715 = vmatprep.subr.bf16.mxu0 0
    %1716 = vmatpush2.bf16.msra.mxu0 0
    %1717 = vmatprep.subr.bf16.mxu0 0
    %1718 = vmatpush2.bf16.msra.mxu0 0
    %1719 = vmatprep.subr.bf16.mxu0 0
    %1720 = vmatpush2.bf16.msra.mxu0 0
    %1721 = vmatprep.subr.bf16.mxu0 0
    %1722 = vmatpush2.bf16.msra.mxu0 0
    %1723 = vmatprep.subr.bf16.mxu0 0
    %1724 = vmatpush2.bf16.msra.mxu0 0
    %1725 = vmatprep.subr.bf16.mxu0 0
    %1726 = vmatpush2.bf16.msra.mxu0 0
    %1727 = vmatprep.subr.bf16.mxu0 0
    %1728 = vmatpush2.bf16.msra.mxu0 0
    %1729 = vmatprep.subr.bf16.mxu0 0
    %1730 = vmatpush2.bf16.msra.mxu0 0
    %1731 = vmatprep.mubr.bf16.mxu0 0
    %1732 = vmatmul.mubr.bf16.gmra.mxu0 %v1697
    %v1733 = vpop.f32.mrf.mxu0
    %v1734 = vadd.f32 %v1682, %v1733
    %v1735 = vpop.f32.mrf.mxu0
    %v1736 = vpop.f32.mrf.mxu0
    %v1737 = vadd.f32 %v1682, %v1736
    %v1738 = vpop.f32.mrf.mxu0
    %1739 = vdwg.mxu0
    %v1740 = vmax.f32 %v1734, 0.0
    %v1741 = vmax.f32 %v1737, 0.0
    %v1742 = vpack.c.bf16 %v1741, %v1740
    %v1743 = vld [vmem:[%s9] sm:$0xf]
    %v1744 = vld [vmem:[%s9 + $0x4] sm:$0xf]
    %v1745 = vld [vmem:[%s9 + $0x8] sm:$0xf]
    %v1746 = vld [vmem:[%s9 + $0xc] sm:$0xf]
    %v1747 = vld [vmem:[%s9 + $0x10] sm:$0xf]
    %v1748 = vld [vmem:[%s9 + $0x14] sm:$0xf]
    %v1749 = vld [vmem:[%s9 + $0x18] sm:$0xf]
    %v1750 = vld [vmem:[%s9 + $0x1c] sm:$0xf]
    %v1751 = vld [vmem:[%s10] sm:$0x1]
    %v1753 = vlaneseq
    %v1754 = vshrl.u32 %v1753, 7
    %v1755 = vsub.s32 0, %v1754
    %v1756 = vrot.slane %v1751, %v1755
    %v1766 = vunpack.c.l.b16 %v1743
    %v1767 = vunpack.c.l.b16 %v1744
    %v1768 = vunpack.c.l.b16 %v1745
    %v1769 = vunpack.c.l.b16 %v1746
    %v1770 = vunpack.c.l.b16 %v1747
    %v1771 = vunpack.c.l.b16 %v1748
    %v1772 = vunpack.c.l.b16 %v1749
    %v1773 = vunpack.c.l.b16 %v1750
    %v1774 = vpack.c.b16 %v1767, %v1766
    %v1775 = vpack.c.b16 %v1769, %v1768
    %v1776 = vpack.c.b16 %v1771, %v1770
    %v1777 = vpack.c.b16 %v1773, %v1772
    %vm1782 = vcmask 523264
    %v1784 = vsel %vm1782, %v1742, 0
    %1786 = vmatprep.subr.bf16.mxu0 0
    %1787 = vmatpush1.bf16.msra.mxu0 0
    %1788 = vmatprep.subr.bf16.mxu0 0
    %1789 = vmatpush1.bf16.msra.mxu0 0
    %1790 = vmatprep.subr.bf16.mxu0 0
    %1791 = vmatpush1.bf16.msra.mxu0 0
    %1792 = vmatprep.subr.bf16.mxu0 0
    %1793 = vmatpush1.bf16.msra.mxu0 0
    %1794 = vmatprep.subr.bf16.mxu0 0
    %1795 = vmatpush1.bf16.msra.mxu0 %v1777
    %1796 = vmatprep.subr.bf16.mxu0 0
    %1797 = vmatpush1.bf16.msra.mxu0 %v1776
    %1798 = vmatprep.subr.bf16.mxu0 0
    %1799 = vmatpush1.bf16.msra.mxu0 %v1775
    %1800 = vmatprep.subr.bf16.mxu0 0
    %1801 = vmatpush1.bf16.msra.mxu0 %v1774
    %1802 = vmatprep.subr.bf16.mxu0 0
    %1803 = vmatpush2.bf16.msra.mxu0 0
    %1804 = vmatprep.subr.bf16.mxu0 0
    %1805 = vmatpush2.bf16.msra.mxu0 0
    %1806 = vmatprep.subr.bf16.mxu0 0
    %1807 = vmatpush2.bf16.msra.mxu0 0
    %1808 = vmatprep.subr.bf16.mxu0 0
    %1809 = vmatpush2.bf16.msra.mxu0 0
    %1810 = vmatprep.subr.bf16.mxu0 0
    %1811 = vmatpush2.bf16.msra.mxu0 0
    %1812 = vmatprep.subr.bf16.mxu0 0
    %1813 = vmatpush2.bf16.msra.mxu0 0
    %1814 = vmatprep.subr.bf16.mxu0 0
    %1815 = vmatpush2.bf16.msra.mxu0 0
    %1816 = vmatprep.subr.bf16.mxu0 0
    %1817 = vmatpush2.bf16.msra.mxu0 0
    %1818 = vmatprep.mubr.bf16.mxu0 0
    %1819 = vmatmul.mubr.bf16.gmra.mxu0 %v1784
    %v1820 = vpop.f32.mrf.mxu0
    %v1821 = vadd.f32 %v1756, %v1820
    %v1822 = vpop.f32.mrf.mxu0
    %v1823 = vpop.f32.mrf.mxu0
    %v1824 = vadd.f32 %v1756, %v1823
    %v1825 = vpop.f32.mrf.mxu0
    %1826 = vdwg.mxu0
    %v1827 = vadd.f32 %v1670, %v1821
    %v1828 = vadd.f32 %v1671, %v1824
    %v1829 = vsel %vm144, %v1827, 0.0
    %1830 = vadd.xlane.f32.xlu0 %v1829
    %v1831 = vpop.xlane.xlu0 %1830
    %v1832 = vsel %vm144, %v1828, 0.0
    %1833 = vadd.xlane.f32.xlu0 %v1832
    %v1834 = vpop.xlane.xlu0 %1833
    %v1835 = vmul.f32 %v1831, %v1629
    %v1836 = vmul.f32 %v1834, %v1629
    %v1837 = vmul.f32 %v1827, %v1827
    %v1838 = vmul.f32 %v1828, %v1828
    %v1839 = vsel %vm144, %v1837, 0.0
    %1840 = vadd.xlane.f32.xlu0 %v1839
    %v1841 = vpop.xlane.xlu0 %1840
    %v1842 = vsel %vm144, %v1838, 0.0
    %1843 = vadd.xlane.f32.xlu0 %v1842
    %v1844 = vpop.xlane.xlu0 %1843
    %v1845 = vmul.f32 %v1841, %v1629
    %v1846 = vmul.f32 %v1844, %v1629
    %v1847 = vmul.f32 %v1835, %v1835
    %v1848 = vmul.f32 %v1836, %v1836
    %v1849 = vsub.f32 %v1845, %v1847
    %v1850 = vsub.f32 %v1846, %v1848
    %v1851 = vsub.f32 %v1827, %v1835
    %v1852 = vsub.f32 %v1828, %v1836
    %v1853 = vadd.f32 %v1849, 1e-05
    %v1854 = vadd.f32 %v1850, 1e-05
    %v1855 = vrsqrt.pop %v1853
    %v1856 = vrsqrt.pop %v1854
    %v1857 = vmul.f32 %v1851, %v1855
    %v1858 = vmul.f32 %v1852, %v1856
    %v1859 = vld [vmem:[%s11] sm:$0x1]
    %v1861 = vlaneseq
    %v1862 = vshrl.u32 %v1861, 7
    %v1863 = vsub.s32 0, %v1862
    %v1864 = vrot.slane %v1859, %v1863
    %v1866 = vmul.f32 %v1857, %v1864
    %v1867 = vmul.f32 %v1858, %v1864
    %v1868 = vld [vmem:[%s12] sm:$0x1]
    %v1870 = vlaneseq
    %v1871 = vshrl.u32 %v1870, 7
    %v1872 = vsub.s32 0, %v1871
    %v1873 = vrot.slane %v1868, %v1872
    %v1875 = vadd.f32 %v1866, %v1873
    %v1876 = vadd.f32 %v1867, %v1873
    %1877 = vst.msk [vmem:[#allocation14] sm:$0xff] %vm144, %v1875
    %1878 = vst.msk [vmem:[#allocation14 + $0x8] sm:$0xff] %vm144, %v1876
    // Predicated region
    $region78: #{tpu_custom_call.1} parent=1 // pred_check
      _
    $region79: #{tpu_custom_call.1} parent=1 // pred_check_branch
      %1880 = sbr.rel (0) target = $region81
    $region80: #{tpu_custom_call.1} parent=1 // pred_region
      %s1882 = ssub.s32 256, 256
      %1883 = vsyncadd [#allocation5], %s1882
      %s1884 = sshll.u32 [#allocation14], 4
      %s1885 = int_to_ptr.vmem [resolvable:$true] %s1884
      %1890 = dma.vmem_to_hbm [thread:$0]  %s1885, 256, %s13, [#allocation5], 128, 128, 8
    $region81: #{tpu_custom_call.1} parent=1 // pred_fallthru
      _
    // Predicated region
    $region82: #{tpu_custom_call.1} parent=1 // pred_check
      _
    $region83: #{tpu_custom_call.1} parent=1 // pred_check_branch
      %1892 = sbr.rel (0) target = $region85
    $region84: #{tpu_custom_call.1} parent=1 // pred_region
      %1893 = dma.done [#allocation5], 256
    $region85: #{tpu_custom_call.1} parent=1 // pred_fallthru
      _
    %1894 = vsyncpa [#allocation4], 1
    %1895 = vsyncpa [#allocation7], 1
    %1896 = vsyncpa [#allocation10], 1
    %1897 = vsyncpa [#allocation13], 1
    %1898 = vsyncpa [#allocation5], 1

</llo_original>
